<compile_context>
chip_gen: v7x
topology: tpu7x:2x2x1
jax: 0.10.0
libtpu: 0.0.40
codegen_flags: <defaults>
</compile_context>

<pallas_src>
import math

import jax
import jax.numpy as jnp
from jax import lax
from jax.experimental import pallas as pl
from jax.experimental.pallas import tpu as pltpu


# ----------------------------- in-kernel helpers -----------------------------

def _gelu_exact(x):
    # PyTorch nn.GELU() default = exact erf formulation.
    return 0.5 * x * (1.0 + lax.erf(x * (1.0 / math.sqrt(2.0))))


def _silu(x):
    return x * jax.nn.sigmoid(x)


def _round_up(x, m):
    return (x + m - 1) // m * m


# --------------------------------- kernel ------------------------------------

def encoder_kernel(t_ref, h_ref, w_ref, wss_ref, c_ref, o_ref):
    """
    t_ref   : (BM, 1)    time values for this batch block
    h_ref   : (BM, F)    features for this batch block
    w_ref   : (2F, F)    [w1 ; w2] stacked along sublanes (resident)
    wss_ref : (F, 4F)    fused [scale1|shift1|scale2|shift2] weights (resident)
    c_ref   : (1, 8F)    [freq | offset | b1 | b2 | bss(+1 folded)] (resident)
    o_ref   : (BM, F)
    """
    F = h_ref.shape[1]

    # static slices of the packed row-constant buffer
    freq   = c_ref[:, 0 * F:1 * F]
    offset = c_ref[:, 1 * F:2 * F]
    b1     = c_ref[:, 2 * F:3 * F]
    b2     = c_ref[:, 3 * F:4 * F]
    bss    = c_ref[:, 4 * F:8 * F]

    # --- SinusoidalPosEmb via a single sin(): cos(x) = sin(x + pi/2) ---
    phase = t_ref[...] * freq + offset            # (BM,1)*(1,F)+(1,F) -> (BM,F)
    emb = jnp.sin(phase)

    # --- time_mlp: Linear -> GELU -> Linear (static row slices of w_ref) ---
    w1 = w_ref[0:F, :]
    w2 = w_ref[F:2 * F, :]
    x = jnp.dot(emb, w1, preferred_element_type=jnp.float32) + b1
    x = _gelu_exact(x)
    t_emb = jnp.dot(x, w2, preferred_element_type=jnp.float32) + b2

    # Both Blocks apply SiLU to the *same* t_emb before their own Linear.
    a = _silu(t_emb)

    # --- single fused (BM, 4F) projection: one lane-dense MXU push ---
    # (+1.0 for the scale halves is already folded into bss)
    ss = jnp.dot(a, wss_ref[...], preferred_element_type=jnp.float32) + bss
    scale1 = ss[:, 0 * F:1 * F]
    shift1 = ss[:, 1 * F:2 * F]
    scale2 = ss[:, 2 * F:3 * F]
    shift2 = ss[:, 3 * F:4 * F]

    h = h_ref[...]
    h = scale1 * h + shift1                       # Block l1
    h = scale2 * h + shift2                       # Block l2
    o_ref[...] = h.astype(o_ref.dtype)


# -------------------------------- wrapper -------------------------------------

def encoder_forward(h, t, packed, *, block_rows=128):
    """h: (B, F) f32, t: (B,) f32, packed: dict of fused params  ->  (B, F) f32."""
    B, F = h.shape

    # batch tile: multiple of 8 sublanes; pad B up to a multiple of the tile
    bm = min(block_rows, _round_up(B, 8))
    Bp = _round_up(B, bm)
    if Bp != B:
        h = jnp.pad(h, ((0, Bp - B), (0, 0)))
        t = jnp.pad(t, ((0, Bp - B),))
    t2d = t.reshape(Bp, 1).astype(jnp.float32)

    grid = (Bp // bm,)

    out = pl.pallas_call(
        encoder_kernel,
        grid_spec=pltpu.PrefetchScalarGridSpec(
            num_scalar_prefetch=0,
            grid=grid,
            in_specs=[
                pl.BlockSpec((bm, 1), lambda i: (i, 0)),          # t  (batch-blocked)
                pl.BlockSpec((bm, F), lambda i: (i, 0)),          # h  (batch-blocked)
                pl.BlockSpec((2 * F, F), lambda i: (0, 0)),       # stacked w1/w2 (resident)
                pl.BlockSpec((F, 4 * F), lambda i: (0, 0)),       # fused scale/shift W (resident)
                pl.BlockSpec((1, 8 * F), lambda i: (0, 0)),       # packed row constants (resident)
            ],
            out_specs=pl.BlockSpec((bm, F), lambda i: (i, 0)),
        ),
        out_shape=jax.ShapeDtypeStruct((Bp, F), jnp.float32),
        compiler_params=pltpu.CompilerParams(
            dimension_semantics=("parallel",),
        ),
    )(t2d, h, packed["w"], packed["wss"], packed["c"])

    return out[:B] if Bp != B else out


def pack_params(p, F):
    """Fuse weights/constants once, outside the kernel.

    Returns:
      w   : (2F, F)  = [w1 ; w2]
      wss : (F, 4F)  = [wsc1 | wsh1 | wsc2 | wsh2]
      c   : (1, 8F)  = [freq | offset | b1 | b2 | bsc1+1 | bsh1 | bsc2+1 | bsh2]
    """
    half_dim = F // 2 + 1
    const = math.log(10000.0) / (half_dim - 1)
    j = jnp.arange(F, dtype=jnp.float32)
    k = jnp.where(j < half_dim, j, j - half_dim)
    freq = jnp.exp(-k * const).reshape(1, F).astype(jnp.float32)
    offset = jnp.where(j < half_dim, 0.0, math.pi / 2.0).reshape(1, F).astype(jnp.float32)

    w = jnp.concatenate([p["w1"], p["w2"]], axis=0)                                # (2F, F)
    wss = jnp.concatenate([p["wsc1"], p["wsh1"], p["wsc2"], p["wsh2"]], axis=1)    # (F, 4F)
    bss = jnp.concatenate(
        [p["bsc1"] + 1.0, p["bsh1"], p["bsc2"] + 1.0, p["bsh2"]], axis=1)          # (1, 4F)
    c = jnp.concatenate([freq, offset, p["b1"], p["b2"], bss], axis=1)             # (1, 8F)

    return {"w": w, "wss": wss, "c": c}


# ----------------------------- pure-JAX reference -----------------------------

def encoder_reference(h, t, p):
    F = h.shape[1]
    half_dim = F // 2 + 1
    c = math.log(10000.0) / (half_dim - 1)
    freqs = jnp.exp(jnp.arange(half_dim, dtype=jnp.float32) * -c)
    e = t[:, None] * freqs[None, :]
    e = jnp.concatenate([jnp.sin(e), jnp.cos(e)], axis=-1)[:, :F]
    x = e @ p["w1"] + p["b1"]
    x = jax.nn.gelu(x, approximate=False)
    t_emb = x @ p["w2"] + p["b2"]
    a = jax.nn.silu(t_emb)
    scale = a @ p["wsc1"] + p["bsc1"]
    shift = a @ p["wsh1"] + p["bsh1"]
    h = (scale + 1.0) * h + shift
    scale = a @ p["wsc2"] + p["bsc2"]
    shift = a @ p["wsh2"] + p["bsh2"]
    h = (scale + 1.0) * h + shift
    return h


# --------------------------------- main ---------------------------------------

def init_params(key, F):
    ks = jax.random.split(key, 12)
    n = lambda k, s: (jax.random.normal(k, s, jnp.float32) * 0.1)
    return {
        "w1": n(ks[0], (F, F)),    "b1": n(ks[1], (1, F)),
        "w2": n(ks[2], (F, F)),    "b2": n(ks[3], (1, F)),
        "wsc1": n(ks[4], (F, F)),  "bsc1": n(ks[5], (1, F)),
        "wsh1": n(ks[6], (F, F)),  "bsh1": n(ks[7], (1, F)),
        "wsc2": n(ks[8], (F, F)),  "bsc2": n(ks[9], (1, F)),
        "wsh2": n(ks[10], (F, F)), "bsh2": n(ks[11], (1, F)),
    }


if __name__ == "__main__":
    # in_ft = out_ft = 32 (Block.lin is unused, so h is (B, out_ft));
    # B = 256 with block_rows = 128 exercises the batch grid (2 steps).
    B, F = 256, 32
    key = jax.random.PRNGKey(0)
    kh, kt, kp = jax.random.split(key, 3)

    h = jax.random.normal(kh, (B, F), jnp.float32)
    t = jax.random.uniform(kt, (B,), jnp.float32, 0.0, 100.0)
    params = init_params(kp, F)

    packed = pack_params(params, F)
    out = jax.block_until_ready(encoder_forward(h, t, packed, block_rows=128))

    ref = encoder_reference(h, t, params)

    assert out.shape == (B, F)
    assert jnp.allclose(out, ref, rtol=1e-2, atol=1e-2), "mismatch vs reference"
    print("KERNEL_OK")
</pallas_src>

<mosaic_0001>
module attributes {stable_mosaic.version = 11 : i64} {
  func.func @encoder_kernel(%arg0: i32, %arg1: memref<128x1xf32, #tpu.memory_space<vmem>>, %arg2: memref<128x32xf32, #tpu.memory_space<vmem>>, %arg3: memref<64x32xf32, #tpu.memory_space<vmem>>, %arg4: memref<32x128xf32, #tpu.memory_space<vmem>>, %arg5: memref<1x256xf32, #tpu.memory_space<vmem>>, %arg6: memref<128x32xf32, #tpu.memory_space<vmem>>) attributes {dimension_semantics = [#tpu.dimension_semantics<parallel>], iteration_bounds = array<i64: 2>, scalar_prefetch = 0 : i64, scratch_operands = 0 : i64, tpu.core_type = #tpu.core_type<tc>, window_params = [{transform_indices = @transform_0, window_bounds = array<i64: 128, 1>}, {transform_indices = @transform_1, window_bounds = array<i64: 128, 32>}, {pipeline_mode = #tpu.pipeline_mode<synchronous>, transform_indices = @transform_2, window_bounds = array<i64: 64, 32>}, {pipeline_mode = #tpu.pipeline_mode<synchronous>, transform_indices = @transform_3, window_bounds = array<i64: 32, 128>}, {pipeline_mode = #tpu.pipeline_mode<synchronous>, transform_indices = @transform_4, window_bounds = array<i64: 1, 256>}, {transform_indices = @transform_5, window_bounds = array<i64: 128, 32>}]} {
    %c0 = arith.constant 0 : index
    %c0_0 = arith.constant 0 : index
    %0 = vector.load %arg5[%c0, %c0_0] : memref<1x256xf32, #tpu.memory_space<vmem>>, vector<1x32xf32>
    %c0_1 = arith.constant 0 : index
    %c32 = arith.constant 32 : index
    %1 = vector.load %arg5[%c0_1, %c32] : memref<1x256xf32, #tpu.memory_space<vmem>>, vector<1x32xf32>
    %c0_2 = arith.constant 0 : index
    %c64 = arith.constant 64 : index
    %2 = vector.load %arg5[%c0_2, %c64] : memref<1x256xf32, #tpu.memory_space<vmem>>, vector<1x32xf32>
    %c0_3 = arith.constant 0 : index
    %c96 = arith.constant 96 : index
    %3 = vector.load %arg5[%c0_3, %c96] : memref<1x256xf32, #tpu.memory_space<vmem>>, vector<1x32xf32>
    %c0_4 = arith.constant 0 : index
    %c128 = arith.constant 128 : index
    %4 = vector.load %arg5[%c0_4, %c128] : memref<1x256xf32, #tpu.memory_space<vmem>>, vector<1x128xf32>
    %c0_5 = arith.constant 0 : index
    %c0_6 = arith.constant 0 : index
    %5 = vector.load %arg1[%c0_5, %c0_6] : memref<128x1xf32, #tpu.memory_space<vmem>>, vector<128x1xf32>
    %6 = vector.broadcast %5 : vector<128x1xf32> to vector<128x32xf32>
    %7 = vector.broadcast %0 : vector<1x32xf32> to vector<128x32xf32>
    %8 = arith.mulf %6, %7 : vector<128x32xf32>
    %9 = vector.broadcast %1 : vector<1x32xf32> to vector<128x32xf32>
    %10 = arith.addf %8, %9 : vector<128x32xf32>
    %11 = math.sin %10 : vector<128x32xf32>
    %c0_7 = arith.constant 0 : index
    %c0_8 = arith.constant 0 : index
    %12 = vector.load %arg3[%c0_7, %c0_8] : memref<64x32xf32, #tpu.memory_space<vmem>>, vector<32x32xf32>
    %c32_9 = arith.constant 32 : index
    %c0_10 = arith.constant 0 : index
    %13 = vector.load %arg3[%c32_9, %c0_10] : memref<64x32xf32, #tpu.memory_space<vmem>>, vector<32x32xf32>
    %cst = arith.constant dense<0.000000e+00> : vector<128x32xf32>
    %14 = tpu.matmul %11, %12, %cst {dimension_numbers = #tpu.dot_dimension_numbers<[1], [0], [0], [1], [0, 0, 1, 1], [], []>} : vector<128x32xf32>, vector<32x32xf32>, vector<128x32xf32> -> vector<128x32xf32>
    %15 = vector.broadcast %2 : vector<1x32xf32> to vector<128x32xf32>
    %16 = arith.addf %14, %15 : vector<128x32xf32>
    %cst_11 = arith.constant 5.000000e-01 : f32
    %17 = vector.broadcast %cst_11 : f32 to vector<128x32xf32>
    %18 = arith.mulf %17, %16 : vector<128x32xf32>
    %cst_12 = arith.constant 0.707106769 : f32
    %19 = vector.broadcast %cst_12 : f32 to vector<128x32xf32>
    %20 = arith.mulf %16, %19 : vector<128x32xf32>
    %21 = math.erf %20 : vector<128x32xf32>
    %cst_13 = arith.constant 1.000000e+00 : f32
    %22 = vector.broadcast %cst_13 : f32 to vector<128x32xf32>
    %23 = arith.addf %22, %21 : vector<128x32xf32>
    %24 = arith.mulf %18, %23 : vector<128x32xf32>
    %cst_14 = arith.constant dense<0.000000e+00> : vector<128x32xf32>
    %25 = tpu.matmul %24, %13, %cst_14 {dimension_numbers = #tpu.dot_dimension_numbers<[1], [0], [0], [1], [0, 0, 1, 1], [], []>} : vector<128x32xf32>, vector<32x32xf32>, vector<128x32xf32> -> vector<128x32xf32>
    %26 = vector.broadcast %3 : vector<1x32xf32> to vector<128x32xf32>
    %27 = arith.addf %25, %26 : vector<128x32xf32>
    %28 = arith.negf %27 : vector<128x32xf32>
    %29 = math.exp %28 : vector<128x32xf32>
    %cst_15 = arith.constant 1.000000e+00 : f32
    %30 = vector.broadcast %cst_15 : f32 to vector<128x32xf32>
    %31 = arith.addf %30, %29 : vector<128x32xf32>
    %32 = arith.divf %30, %31 : vector<128x32xf32>
    %33 = arith.mulf %27, %32 : vector<128x32xf32>
    %c0_16 = arith.constant 0 : index
    %c0_17 = arith.constant 0 : index
    %34 = vector.load %arg4[%c0_16, %c0_17] : memref<32x128xf32, #tpu.memory_space<vmem>>, vector<32x128xf32>
    %cst_18 = arith.constant dense<0.000000e+00> : vector<128x128xf32>
    %35 = tpu.matmul %33, %34, %cst_18 {dimension_numbers = #tpu.dot_dimension_numbers<[1], [0], [0], [1], [0, 0, 1, 1], [], []>} : vector<128x32xf32>, vector<32x128xf32>, vector<128x128xf32> -> vector<128x128xf32>
    %36 = vector.broadcast %4 : vector<1x128xf32> to vector<128x128xf32>
    %37 = arith.addf %35, %36 : vector<128x128xf32>
    %38 = vector.extract_strided_slice %37 {offsets = [0, 0], sizes = [128, 32], strides = [1, 1]} : vector<128x128xf32> to vector<128x32xf32>
    %39 = vector.extract_strided_slice %37 {offsets = [0, 32], sizes = [128, 32], strides = [1, 1]} : vector<128x128xf32> to vector<128x32xf32>
    %40 = vector.extract_strided_slice %37 {offsets = [0, 64], sizes = [128, 32], strides = [1, 1]} : vector<128x128xf32> to vector<128x32xf32>
    %41 = vector.extract_strided_slice %37 {offsets = [0, 96], sizes = [128, 32], strides = [1, 1]} : vector<128x128xf32> to vector<128x32xf32>
    %c0_19 = arith.constant 0 : index
    %c0_20 = arith.constant 0 : index
    %42 = vector.load %arg2[%c0_19, %c0_20] : memref<128x32xf32, #tpu.memory_space<vmem>>, vector<128x32xf32>
    %43 = arith.mulf %38, %42 : vector<128x32xf32>
    %44 = arith.addf %43, %39 : vector<128x32xf32>
    %45 = arith.mulf %40, %44 : vector<128x32xf32>
    %46 = arith.addf %45, %41 : vector<128x32xf32>
    %c0_21 = arith.constant 0 : index
    %c0_22 = arith.constant 0 : index
    %47 = vector.load %arg6[%c0_21, %c0_22] : memref<128x32xf32, #tpu.memory_space<vmem>>, vector<128x32xf32>
    tpu.vector_store %arg6[%c0_21, %c0_22], %46 {strides = array<i32>} : memref<128x32xf32, #tpu.memory_space<vmem>>, vector<128x32xf32>,
    return
  }
  func.func @transform_0(%arg0: i32) -> (i32, i32) {
    %c0_i32 = arith.constant 0 : i32
    %c0_i32_0 = arith.constant 0 : i32
    return %arg0, %c0_i32 : i32, i32
  }
  func.func @transform_1(%arg0: i32) -> (i32, i32) {
    %c0_i32 = arith.constant 0 : i32
    %c0_i32_0 = arith.constant 0 : i32
    return %arg0, %c0_i32 : i32, i32
  }
  func.func @transform_2(%arg0: i32) -> (i32, i32) {
    %c0_i32 = arith.constant 0 : i32
    %c0_i32_0 = arith.constant 0 : i32
    %c0_i32_1 = arith.constant 0 : i32
    return %c0_i32, %c0_i32_0 : i32, i32
  }
  func.func @transform_3(%arg0: i32) -> (i32, i32) {
    %c0_i32 = arith.constant 0 : i32
    %c0_i32_0 = arith.constant 0 : i32
    %c0_i32_1 = arith.constant 0 : i32
    return %c0_i32, %c0_i32_0 : i32, i32
  }
  func.func @transform_4(%arg0: i32) -> (i32, i32) {
    %c0_i32 = arith.constant 0 : i32
    %c0_i32_0 = arith.constant 0 : i32
    %c0_i32_1 = arith.constant 0 : i32
    return %c0_i32, %c0_i32_0 : i32, i32
  }
  func.func @transform_5(%arg0: i32) -> (i32, i32) {
    %c0_i32 = arith.constant 0 : i32
    %c0_i32_0 = arith.constant 0 : i32
    return %arg0, %c0_i32 : i32, i32
  }
}

</mosaic_0001>

<llo_original>
// kernel: tpu_custom_call.1
$region0: #{tpu_custom_call.1}
  #allocation0 [shape = 'u32[]', space=smem, size = 0x4, offset = 0x4, fixed_abs, tag = 'smem constant byte address 0x4 - core index']
  #allocation1 [shape = 'u32[144,128]{1,0:T(1,128)}', space=vmem, size = 0x12000, scoped, tag = 'internal scratch']
  %s0 = inlined_call_operand.vmem [shape: f32[256,1], index: 0, kind: input, shape index: {}]
  %s1 = inlined_call_operand.vmem [shape: f32[256,32], index: 1, kind: input, shape index: {}]
  %s2 = inlined_call_operand.vmem [shape: f32[64,32], index: 2, kind: input, shape index: {}]
  %s3 = inlined_call_operand.vmem [shape: f32[32,128], index: 3, kind: input, shape index: {}]
  %s4 = inlined_call_operand.vmem [shape: f32[1,256], index: 4, kind: input, shape index: {}]
  %s5 = inlined_call_operand.vmem [shape: f32[256,32], index: 5, kind: output, shape index: {}]
  %s6 = sld [smem:[#allocation0]]
  $region53: #{tpu_custom_call.1} parent=0
    _
  %s8 = ssub.s32 1, %s6
  %s9 = scalar_select 0, %s8, %s6
  loop: start=0, step=1, limit=4
  $region2: #{tpu_custom_call.1} parent=0 // loop_pre_header
    _
  $region3: #{tpu_custom_call.1} parent=0 // loop_header
    %s11 = sphi 0, %s15
    %p12 = scmp.ge.s32.totalorder %s11, 4
    %s21 = sphi 0, %s23
    %s24 = sphi 0, %s21
    %s25 = sphi 0, %s24
    %s41 = sphi 0, %s25
    %s47 = sphi 0, %s49
    %s50 = sphi 0, %s47
    %s51 = sphi 0, %s50
    %s67 = sphi 0, %s51
    %s71 = sphi 0, %s71
    %s73 = sphi 0, %s71
    %s74 = sphi 0, %s73
    %s88 = sphi 0, %s74
    %s92 = sphi 0, %s92
    %s94 = sphi 0, %s92
    %s95 = sphi 0, %s94
    %s109 = sphi 0, %s95
    %s113 = sphi 0, %s113
    %s115 = sphi 0, %s113
    %s116 = sphi 0, %s115
    %s130 = sphi 0, %s116
    %s136 = sphi 0, %s138
    %s139 = sphi 0, %s136
    %s140 = sphi 0, %s139
    %s156 = sphi 0, %s140
  $region4: #{tpu_custom_call.1} parent=0 // loop_header_branch
    %14 = sbr.rel (%p12) target = $region8
  $region5: #{tpu_custom_call.1} parent=0 // loop_body
    %s16 = ssub.s32 %s11, 1
    %s17 = ssub.s32 %s11, 2
    %s18 = sadd.s32 %s11, 1
    %s19 = ssub.s32 %s11, %s18
    %p20 = scmp.eq.s32.totalorder %s19, 0
    %s22 = sadd.s32 %s21, 1
    %s23 = scalar_select %p20, %s21, %s22
    %p26 = pneg %p20
    %p27 = scmp.eq.s32.totalorder %s11, 1
    %p28 = por %p26, %p27
    %p29 = scmp.ne.s32.totalorder %s21, %s24
    %p30 = scmp.eq.s32.totalorder %s11, 0
    %p31 = por %p29, %p30
    %p32 = scmp.ne.s32.totalorder %s21, %s24
    %p33 = scmp.eq.s32.totalorder %s16, 1
    %p34 = por %p32, %p33
    %p35 = scmp.ne.s32.totalorder %s24, %s25
    %p36 = scmp.eq.s32.totalorder %s16, 0
    %p37 = por %p35, %p36
    %p38 = scmp.ne.s32.totalorder %s24, %s25
    %p39 = scmp.eq.s32.totalorder %s17, 1
    %p40 = por %p38, %p39
    %p42 = scmp.ne.s32.totalorder %s25, %s41
    %p43 = scmp.eq.s32.totalorder %s17, 0
    %p44 = por %p42, %p43
    %s45 = ssub.s32 %s11, %s18
    %p46 = scmp.eq.s32.totalorder %s45, 0
    %s48 = sadd.s32 %s47, 1
    %s49 = scalar_select %p46, %s47, %s48
    %p52 = pneg %p46
    %p53 = scmp.eq.s32.totalorder %s11, 1
    %p54 = por %p52, %p53
    %p55 = scmp.ne.s32.totalorder %s47, %s50
    %p56 = scmp.eq.s32.totalorder %s11, 0
    %p57 = por %p55, %p56
    %p58 = scmp.ne.s32.totalorder %s47, %s50
    %p59 = scmp.eq.s32.totalorder %s16, 1
    %p60 = por %p58, %p59
    %p61 = scmp.ne.s32.totalorder %s50, %s51
    %p62 = scmp.eq.s32.totalorder %s16, 0
    %p63 = por %p61, %p62
    %p64 = scmp.ne.s32.totalorder %s50, %s51
    %p65 = scmp.eq.s32.totalorder %s17, 1
    %p66 = por %p64, %p65
    %p68 = scmp.ne.s32.totalorder %s51, %s67
    %p69 = scmp.eq.s32.totalorder %s17, 0
    %p70 = por %p68, %p69
    %s72 = sadd.s32 %s71, 1
    %p75 = scmp.eq.s32.totalorder %s11, 1
    %p76 = scmp.ne.s32.totalorder %s71, %s73
    %p77 = scmp.eq.s32.totalorder %s11, 0
    %p78 = por %p76, %p77
    %p79 = scmp.ne.s32.totalorder %s71, %s73
    %p80 = scmp.eq.s32.totalorder %s16, 1
    %p81 = por %p79, %p80
    %p82 = scmp.ne.s32.totalorder %s73, %s74
    %p83 = scmp.eq.s32.totalorder %s16, 0
    %p84 = por %p82, %p83
    %p85 = scmp.ne.s32.totalorder %s73, %s74
    %p86 = scmp.eq.s32.totalorder %s17, 1
    %p87 = por %p85, %p86
    %p89 = scmp.ne.s32.totalorder %s74, %s88
    %p90 = scmp.eq.s32.totalorder %s17, 0
    %p91 = por %p89, %p90
    %s93 = sadd.s32 %s92, 1
    %p96 = scmp.eq.s32.totalorder %s11, 1
    %p97 = scmp.ne.s32.totalorder %s92, %s94
    %p98 = scmp.eq.s32.totalorder %s11, 0
    %p99 = por %p97, %p98
    %p100 = scmp.ne.s32.totalorder %s92, %s94
    %p101 = scmp.eq.s32.totalorder %s16, 1
    %p102 = por %p100, %p101
    %p103 = scmp.ne.s32.totalorder %s94, %s95
    %p104 = scmp.eq.s32.totalorder %s16, 0
    %p105 = por %p103, %p104
    %p106 = scmp.ne.s32.totalorder %s94, %s95
    %p107 = scmp.eq.s32.totalorder %s17, 1
    %p108 = por %p106, %p107
    %p110 = scmp.ne.s32.totalorder %s95, %s109
    %p111 = scmp.eq.s32.totalorder %s17, 0
    %p112 = por %p110, %p111
    %s114 = sadd.s32 %s113, 1
    %p117 = scmp.eq.s32.totalorder %s11, 1
    %p118 = scmp.ne.s32.totalorder %s113, %s115
    %p119 = scmp.eq.s32.totalorder %s11, 0
    %p120 = por %p118, %p119
    %p121 = scmp.ne.s32.totalorder %s113, %s115
    %p122 = scmp.eq.s32.totalorder %s16, 1
    %p123 = por %p121, %p122
    %p124 = scmp.ne.s32.totalorder %s115, %s116
    %p125 = scmp.eq.s32.totalorder %s16, 0
    %p126 = por %p124, %p125
    %p127 = scmp.ne.s32.totalorder %s115, %s116
    %p128 = scmp.eq.s32.totalorder %s17, 1
    %p129 = por %p127, %p128
    %p131 = scmp.ne.s32.totalorder %s116, %s130
    %p132 = scmp.eq.s32.totalorder %s17, 0
    %p133 = por %p131, %p132
    %s134 = ssub.s32 %s11, %s18
    %p135 = scmp.eq.s32.totalorder %s134, 0
    %s137 = sadd.s32 %s136, 1
    %s138 = scalar_select %p135, %s136, %s137
    %p141 = pneg %p135
    %p142 = scmp.eq.s32.totalorder %s11, 1
    %p143 = por %p141, %p142
    %p144 = scmp.ne.s32.totalorder %s136, %s139
    %p145 = scmp.eq.s32.totalorder %s11, 0
    %p146 = por %p144, %p145
    %p147 = scmp.ne.s32.totalorder %s136, %s139
    %p148 = scmp.eq.s32.totalorder %s16, 1
    %p149 = por %p147, %p148
    %p150 = scmp.ne.s32.totalorder %s139, %s140
    %p151 = scmp.eq.s32.totalorder %s16, 0
    %p152 = por %p150, %p151
    %p153 = scmp.ne.s32.totalorder %s139, %s140
    %p154 = scmp.eq.s32.totalorder %s17, 1
    %p155 = por %p153, %p154
    %p157 = scmp.ne.s32.totalorder %s140, %s156
    %p158 = scmp.eq.s32.totalorder %s17, 0
    %p159 = por %p157, %p158
    %p160 = scmp.le.s32.totalorder 1, %s11
    %p161 = scmp.lt.s32.totalorder %s11, 3
    %p162 = pnand %p160, %p161
    %p163 = pneg %p162
    // Predicated region
    $region9: #{tpu_custom_call.1} parent=5 // pred_check
      _
    $region10: #{tpu_custom_call.1} parent=5 // pred_check_branch
      %165 = sbr.rel (%p162) target = $region12
    $region11: #{tpu_custom_call.1} parent=5 // pred_region
      %s166 = ssub.s32 %s11, 1
      // Predicated region
      $region13: #{tpu_custom_call.1} parent=11 // pred_check
        %p167 = pneg %p84
      $region14: #{tpu_custom_call.1} parent=11 // pred_check_branch
        %169 = sbr.rel (%p167) target = $region16
      $region15: #{tpu_custom_call.1} parent=11 // pred_region
        _
      $region16: #{tpu_custom_call.1} parent=11 // pred_fallthru
        _
      // Predicated region
      $region17: #{tpu_custom_call.1} parent=11 // pred_check
        %p170 = pneg %p105
      $region18: #{tpu_custom_call.1} parent=11 // pred_check_branch
        %172 = sbr.rel (%p170) target = $region20
      $region19: #{tpu_custom_call.1} parent=11 // pred_region
        _
      $region20: #{tpu_custom_call.1} parent=11 // pred_fallthru
        _
      // Predicated region
      $region21: #{tpu_custom_call.1} parent=11 // pred_check
        %p173 = pneg %p126
      $region22: #{tpu_custom_call.1} parent=11 // pred_check_branch
        %175 = sbr.rel (%p173) target = $region24
      $region23: #{tpu_custom_call.1} parent=11 // pred_region
        _
      $region24: #{tpu_custom_call.1} parent=11 // pred_fallthru
        _
    $region12: #{tpu_custom_call.1} parent=5 // pred_fallthru
      _
    %p176 = scmp.lt.s32.totalorder %s11, 2
    // Predicated region
    $region25: #{tpu_custom_call.1} parent=5 // pred_check
      %p177 = pneg %p176
    $region26: #{tpu_custom_call.1} parent=5 // pred_check_branch
      %179 = sbr.rel (%p177) target = $region28
    $region27: #{tpu_custom_call.1} parent=5 // pred_region
      // Predicated region
      $region29: #{tpu_custom_call.1} parent=27 // pred_check
        %p180 = pneg %p31
      $region30: #{tpu_custom_call.1} parent=27 // pred_check_branch
        %182 = sbr.rel (%p180) target = $region32
      $region31: #{tpu_custom_call.1} parent=27 // pred_region
        %s183 = smul.u32 16, %s11
        %p184 = scmp.lt.s32.totalorder %s183, 31
        %s185 = scalar_select %p184, %s183, 31
        %s186 = smul.addr %s185, 8
        %s187 = scalar_lea.vmem %s0, %s186
        %s188 = smul.u32 16, %s11
      $region32: #{tpu_custom_call.1} parent=27 // pred_fallthru
        _
      // Predicated region
      $region33: #{tpu_custom_call.1} parent=27 // pred_check
        %p189 = pneg %p57
      $region34: #{tpu_custom_call.1} parent=27 // pred_check_branch
        %191 = sbr.rel (%p189) target = $region36
      $region35: #{tpu_custom_call.1} parent=27 // pred_region
        %s192 = smul.u32 16, %s11
        %p193 = scmp.lt.s32.totalorder %s192, 31
        %s194 = scalar_select %p193, %s192, 31
        %s195 = smul.addr %s194, 8
        %s196 = scalar_lea.vmem %s1, %s195
        %s197 = smul.u32 16, %s11
      $region36: #{tpu_custom_call.1} parent=27 // pred_fallthru
        _
    $region28: #{tpu_custom_call.1} parent=5 // pred_fallthru
      _
    %p198 = scmp.le.s32.totalorder 1, %s11
    %p199 = scmp.lt.s32.totalorder %s11, 3
    %p200 = pnand %p198, %p199
    %p201 = pneg %p200
    // Predicated region
    $region37: #{tpu_custom_call.1} parent=5 // pred_check
      _
    $region38: #{tpu_custom_call.1} parent=5 // pred_check_branch
      %203 = sbr.rel (%p200) target = $region40
    $region39: #{tpu_custom_call.1} parent=5 // pred_region
      %s204 = ssub.s32 %s11, 1
      %s205 = smul.u32 16, %s16
      %p206 = scmp.lt.s32.totalorder %s205, 31
      %s207 = scalar_select %p206, %s205, 31
      %s208 = smul.addr %s207, 8
      %s209 = scalar_lea.vmem %s0, %s208
      %p210 = pneg %p37
      %p211 = pneg %p34
      %s212 = smul.u32 16, %s16
      %p213 = scmp.lt.s32.totalorder %s212, 31
      %s214 = scalar_select %p213, %s212, 31
      %s215 = smul.addr %s214, 8
      %s216 = scalar_lea.vmem %s1, %s215
      %p217 = pneg %p63
      %p218 = pneg %p60
      %p219 = pneg %p84
      %p220 = pneg %p81
      %p221 = pneg %p105
      %p222 = pneg %p102
      %p223 = pneg %p126
      %p224 = pneg %p123
      %p225 = pneg %p152
      %p226 = pneg %p149
      %s227 = smul.u32 16, %s16
      %p228 = scmp.lt.s32.totalorder %s227, 31
      %s229 = scalar_select %p228, %s227, 31
      %s230 = smul.addr %s229, 8
      %s231 = scalar_lea.vmem %s5, %s230
      %s232 = smul.u32 16, %s16
      %p233 = scmp.lt.s32.totalorder %s232, 31
      %s234 = scalar_select %p233, %s232, 31
      %s235 = smul.addr %s234, 8
      %s236 = scalar_lea.vmem %s0, %s235
      %s237 = smul.u32 16, %s16
      %s238 = smul.u32 16, %s16
      %p239 = scmp.lt.s32.totalorder %s238, 31
      %s240 = scalar_select %p239, %s238, 31
      %s241 = smul.addr %s240, 8
      %s242 = scalar_lea.vmem %s1, %s241
      %s243 = smul.u32 16, %s16
      %s244 = smul.u32 16, %s16
      %p245 = scmp.lt.s32.totalorder %s244, 31
      %s246 = scalar_select %p245, %s244, 31
      %s247 = smul.addr %s246, 8
      %s248 = scalar_lea.vmem %s5, %s247
      %s249 = smul.u32 16, %s16
      %v250 = vld [vmem:[%s4] sm:$0x1]
      %v251 = vld [vmem:[%s4 + $0x1] sm:$0x1]
      %v252 = vld [vmem:[%s236] sm:$0xff]
      %v253 = vld [vmem:[%s236 + $0x8] sm:$0xff]
      %v254 = vld [vmem:[%s236 + $0x10] sm:$0xff]
      %v255 = vld [vmem:[%s236 + $0x18] sm:$0xff]
      %v256 = vld [vmem:[%s236 + $0x20] sm:$0xff]
      %v257 = vld [vmem:[%s236 + $0x28] sm:$0xff]
      %v258 = vld [vmem:[%s236 + $0x30] sm:$0xff]
      %v259 = vld [vmem:[%s236 + $0x38] sm:$0xff]
      %v260 = vld [vmem:[%s236 + $0x40] sm:$0xff]
      %v261 = vld [vmem:[%s236 + $0x48] sm:$0xff]
      %v262 = vld [vmem:[%s236 + $0x50] sm:$0xff]
      %v263 = vld [vmem:[%s236 + $0x58] sm:$0xff]
      %v264 = vld [vmem:[%s236 + $0x60] sm:$0xff]
      %v265 = vld [vmem:[%s236 + $0x68] sm:$0xff]
      %v266 = vld [vmem:[%s236 + $0x70] sm:$0xff]
      %v267 = vld [vmem:[%s236 + $0x78] sm:$0xff]
      %269 = vset.pattern.permute.xlu0 0
      %270 = vperm.xlu0 %269, %v252
      %v271 = vpop.permute.xlu0 %270
      %274 = vset.pattern.permute.xlu0 0
      %275 = vperm.xlu0 %274, %v253
      %v276 = vpop.permute.xlu0 %275
      %279 = vset.pattern.permute.xlu0 0
      %280 = vperm.xlu0 %279, %v254
      %v281 = vpop.permute.xlu0 %280
      %284 = vset.pattern.permute.xlu0 0
      %285 = vperm.xlu0 %284, %v255
      %v286 = vpop.permute.xlu0 %285
      %289 = vset.pattern.permute.xlu0 0
      %290 = vperm.xlu0 %289, %v256
      %v291 = vpop.permute.xlu0 %290
      %294 = vset.pattern.permute.xlu0 0
      %295 = vperm.xlu0 %294, %v257
      %v296 = vpop.permute.xlu0 %295
      %299 = vset.pattern.permute.xlu0 0
      %300 = vperm.xlu0 %299, %v258
      %v301 = vpop.permute.xlu0 %300
      %304 = vset.pattern.permute.xlu0 0
      %305 = vperm.xlu0 %304, %v259
      %v306 = vpop.permute.xlu0 %305
      %309 = vset.pattern.permute.xlu0 0
      %310 = vperm.xlu0 %309, %v260
      %v311 = vpop.permute.xlu0 %310
      %314 = vset.pattern.permute.xlu0 0
      %315 = vperm.xlu0 %314, %v261
      %v316 = vpop.permute.xlu0 %315
      %319 = vset.pattern.permute.xlu0 0
      %320 = vperm.xlu0 %319, %v262
      %v321 = vpop.permute.xlu0 %320
      %324 = vset.pattern.permute.xlu0 0
      %325 = vperm.xlu0 %324, %v263
      %v326 = vpop.permute.xlu0 %325
      %329 = vset.pattern.permute.xlu0 0
      %330 = vperm.xlu0 %329, %v264
      %v331 = vpop.permute.xlu0 %330
      %334 = vset.pattern.permute.xlu0 0
      %335 = vperm.xlu0 %334, %v265
      %v336 = vpop.permute.xlu0 %335
      %339 = vset.pattern.permute.xlu0 0
      %340 = vperm.xlu0 %339, %v266
      %v341 = vpop.permute.xlu0 %340
      %344 = vset.pattern.permute.xlu0 0
      %345 = vperm.xlu0 %344, %v267
      %v346 = vpop.permute.xlu0 %345
      %v349 = vlaneseq
      %v350 = vshrl.u32 %v349, 7
      %v351 = vsub.s32 0, %v350
      %v352 = vrot.slane %v250, %v351
      %v354 = vmul.f32 %v271, %v352
      %v355 = vmul.f32 %v276, %v352
      %v356 = vmul.f32 %v281, %v352
      %v357 = vmul.f32 %v286, %v352
      %v358 = vmul.f32 %v291, %v352
      %v359 = vmul.f32 %v296, %v352
      %v360 = vmul.f32 %v301, %v352
      %v361 = vmul.f32 %v306, %v352
      %v362 = vmul.f32 %v311, %v352
      %v363 = vmul.f32 %v316, %v352
      %v364 = vmul.f32 %v321, %v352
      %v365 = vmul.f32 %v326, %v352
      %v366 = vmul.f32 %v331, %v352
      %v367 = vmul.f32 %v336, %v352
      %v368 = vmul.f32 %v341, %v352
      %v369 = vmul.f32 %v346, %v352
      %370 = vrot.lane.b32.xlu0 %v352, 96
      %v371 = vpop.permute.xlu0 %370
      %v373 = vadd.f32 %v354, %v371
      %v374 = vadd.f32 %v355, %v371
      %v375 = vadd.f32 %v356, %v371
      %v376 = vadd.f32 %v357, %v371
      %v377 = vadd.f32 %v358, %v371
      %v378 = vadd.f32 %v359, %v371
      %v379 = vadd.f32 %v360, %v371
      %v380 = vadd.f32 %v361, %v371
      %v381 = vadd.f32 %v362, %v371
      %v382 = vadd.f32 %v363, %v371
      %v383 = vadd.f32 %v364, %v371
      %v384 = vadd.f32 %v365, %v371
      %v385 = vadd.f32 %v366, %v371
      %v386 = vadd.f32 %v367, %v371
      %v387 = vadd.f32 %v368, %v371
      %v388 = vadd.f32 %v369, %v371
      %v389 = vand.u32 2147483647, %v373
      %vm390 = vcmp.le.f32.partialorder %v389, 0.7853982
      %vm391 = vcmp.lt.s32.totalorder %v373, 0
      %v392 = vand.u32 %v373, 2139095040
      %v393 = vshrl.u32 %v392, 23
      %v394 = vsub.s32 %v393, 127
      %v395 = vand.u32 2147483647, %v373
      %v396 = vand.u32 %v395, 8388607
      %v397 = vor.u32 %v396, 8388608
      %v398 = vsub.s32 0, %v397
      %v399 = vadd.s32 %v394, 1
      %vm400 = vcmp.gt.s32.totalorder %v399, 0
      %v401 = vsel %vm400, %v399, 0
      %v402 = vshrl.u32 %v401, 5
      %v403 = vand.u32 %v401, 31
      %v404 = vsub.s32 32, %v403
      %v405 = vshrl.u32 683565275, %v404
      %v406 = vshll.u32 683565275, %v403
      %v407 = vshrl.u32 2475754826, %v404
      %v408 = vor.u32 %v406, %v407
      %v409 = vshll.u32 2475754826, %v403
      %v410 = vshrl.u32 2131351028, %v404
      %v411 = vor.u32 %v409, %v410
      %v412 = vshll.u32 2131351028, %v403
      %v413 = vshrl.u32 2102212464, %v404
      %v414 = vor.u32 %v412, %v413
      %v415 = vshll.u32 2102212464, %v403
      %v416 = vshrl.u32 920167782, %v404
      %v417 = vor.u32 %v415, %v416
      %v418 = vshll.u32 920167782, %v403
      %v419 = vshrl.u32 1326507024, %v404
      %v420 = vor.u32 %v418, %v419
      %vm421 = vcmp.lt.s32.totalorder %v402, 1
      %vm422 = vcmp.lt.s32.totalorder %v402, 2
      %vm423 = vcmp.lt.s32.totalorder %v402, 3
      %vm424 = vcmp.lt.s32.totalorder %v402, 4
      %v425 = vsel %vm421, %v405, %v408
      %v426 = vsel %vm424, %v414, 2102212464
      %v427 = vsel %vm423, %v411, %v426
      %v428 = vsel %vm422, %v425, %v427
      %v429 = vsel %vm421, %v408, %v411
      %v430 = vsel %vm424, %v417, 920167782
      %v431 = vsel %vm423, %v414, %v430
      %v432 = vsel %vm422, %v429, %v431
      %v433 = vsel %vm421, %v411, %v414
      %v434 = vsel %vm424, %v420, 1326507024
      %v435 = vsel %vm423, %v417, %v434
      %v436 = vsel %vm422, %v433, %v435
      %v437 = vshll.u32 %v397, 8
      %v438 = vmul.u32.u64.compose %v437, %v436
      %v439 = vextract.low.u32 %v438
      %v440 = vextract.high.u32 %v438
      %v441 = vmul.u32.u64.compose %v437, %v432
      %v442 = vextract.low.u32 %v441
      %v443 = vextract.high.u32 %v441
      %v444 = vmul.u32 %v437, %v428
      %v445 = vadd.s32 %v440, %v442
      %vm446 = vc.u32 %v440, %v442
      %v447 = vadd.s32 %v443, 1
      %v448 = vsel %vm446, %v447, %v443
      %v449 = vadd.s32 %v444, %v448
      %v450 = vadd.s32 %v449, 536870912
      %v451 = vshrl.u32 %v450, 30
      %v452 = vshll.u32 %v451, 30
      %v453 = vsub.s32 %v449, %v452
      %vm454 = vcmp.lt.s32.totalorder %v453, 0
      %v455 = vsub.s32 0, %v453
      %v456 = vsel %vm454, %v455, %v453
      %v457 = vclz %v456
      %v458 = vsub.s32 %v457, 2
      %vm459 = vcmp.gt.s32.totalorder 0, %v458
      %v460 = vsel %vm459, 0, %v458
      %v461 = vsub.s32 32, %v460
      %v462 = vshll.u32 %v453, %v460
      %v463 = vshrl.u32 %v445, %v461
      %v464 = vor.u32 %v462, %v463
      %v465 = vsub.s32 4294967266, %v460
      %v466 = vadd.s32 %v465, 127
      %v467 = vshll.u32 %v466, 23
      %v468 = vor.u32 4788187, %v467
      %v469 = vand.u32 2147483647, %v468
      %v471 = vcvt.s32.f32 %v464
      %v472 = vmul.f32 %v471, %v469
      %v473 = vxor.u32 %v472, 2147483648
      %v474 = vsel %vm391, %v473, %v472
      %v475 = vsub.s32 4, %v451
      %v476 = vsel %vm391, %v475, %v451
      %v477 = vsel %vm390, %v373, %v474
      %v478 = vsel %vm390, 0, %v476
      %v479 = vcosq.f32.pop %v477
      %v480 = vsinq.f32.pop %v477
      %vm481 = vweird.f32 %v373
      %v482 = vadd.s32 %v478, 3
      %v483 = vand.u32 %v482, 3
      %vm484 = vcmp.lt.s32.totalorder %v483, 2
      %vm485 = vcmp.eq.s32.totalorder %v483, 0
      %v486 = vxor.u32 %v480, 2147483648
      %v487 = vsel %vm485, %v479, %v486
      %vm488 = vcmp.eq.s32.totalorder %v483, 2
      %v489 = vxor.u32 %v479, 2147483648
      %v490 = vsel %vm488, %v489, %v480
      %v491 = vsel %vm484, %v487, %v490
      %v492 = vsel %vm481, nan, %v491
      %v493 = vand.u32 2147483647, %v374
      %vm494 = vcmp.le.f32.partialorder %v493, 0.7853982
      %vm495 = vcmp.lt.s32.totalorder %v374, 0
      %v496 = vand.u32 %v374, 2139095040
      %v497 = vshrl.u32 %v496, 23
      %v498 = vsub.s32 %v497, 127
      %v499 = vand.u32 2147483647, %v374
      %v500 = vand.u32 %v499, 8388607
      %v501 = vor.u32 %v500, 8388608
      %v502 = vsub.s32 0, %v501
      %v503 = vadd.s32 %v498, 1
      %vm504 = vcmp.gt.s32.totalorder %v503, 0
      %v505 = vsel %vm504, %v503, 0
      %v506 = vshrl.u32 %v505, 5
      %v507 = vand.u32 %v505, 31
      %v508 = vsub.s32 32, %v507
      %v509 = vshrl.u32 683565275, %v508
      %v510 = vshll.u32 683565275, %v507
      %v511 = vshrl.u32 2475754826, %v508
      %v512 = vor.u32 %v510, %v511
      %v513 = vshll.u32 2475754826, %v507
      %v514 = vshrl.u32 2131351028, %v508
      %v515 = vor.u32 %v513, %v514
      %v516 = vshll.u32 2131351028, %v507
      %v517 = vshrl.u32 2102212464, %v508
      %v518 = vor.u32 %v516, %v517
      %v519 = vshll.u32 2102212464, %v507
      %v520 = vshrl.u32 920167782, %v508
      %v521 = vor.u32 %v519, %v520
      %v522 = vshll.u32 920167782, %v507
      %v523 = vshrl.u32 1326507024, %v508
      %v524 = vor.u32 %v522, %v523
      %vm525 = vcmp.lt.s32.totalorder %v506, 1
      %vm526 = vcmp.lt.s32.totalorder %v506, 2
      %vm527 = vcmp.lt.s32.totalorder %v506, 3
      %vm528 = vcmp.lt.s32.totalorder %v506, 4
      %v529 = vsel %vm525, %v509, %v512
      %v530 = vsel %vm528, %v518, 2102212464
      %v531 = vsel %vm527, %v515, %v530
      %v532 = vsel %vm526, %v529, %v531
      %v533 = vsel %vm525, %v512, %v515
      %v534 = vsel %vm528, %v521, 920167782
      %v535 = vsel %vm527, %v518, %v534
      %v536 = vsel %vm526, %v533, %v535
      %v537 = vsel %vm525, %v515, %v518
      %v538 = vsel %vm528, %v524, 1326507024
      %v539 = vsel %vm527, %v521, %v538
      %v540 = vsel %vm526, %v537, %v539
      %v541 = vshll.u32 %v501, 8
      %v542 = vmul.u32.u64.compose %v541, %v540
      %v543 = vextract.low.u32 %v542
      %v544 = vextract.high.u32 %v542
      %v545 = vmul.u32.u64.compose %v541, %v536
      %v546 = vextract.low.u32 %v545
      %v547 = vextract.high.u32 %v545
      %v548 = vmul.u32 %v541, %v532
      %v549 = vadd.s32 %v544, %v546
      %vm550 = vc.u32 %v544, %v546
      %v551 = vadd.s32 %v547, 1
      %v552 = vsel %vm550, %v551, %v547
      %v553 = vadd.s32 %v548, %v552
      %v554 = vadd.s32 %v553, 536870912
      %v555 = vshrl.u32 %v554, 30
      %v556 = vshll.u32 %v555, 30
      %v557 = vsub.s32 %v553, %v556
      %vm558 = vcmp.lt.s32.totalorder %v557, 0
      %v559 = vsub.s32 0, %v557
      %v560 = vsel %vm558, %v559, %v557
      %v561 = vclz %v560
      %v562 = vsub.s32 %v561, 2
      %vm563 = vcmp.gt.s32.totalorder 0, %v562
      %v564 = vsel %vm563, 0, %v562
      %v565 = vsub.s32 32, %v564
      %v566 = vshll.u32 %v557, %v564
      %v567 = vshrl.u32 %v549, %v565
      %v568 = vor.u32 %v566, %v567
      %v569 = vsub.s32 4294967266, %v564
      %v570 = vadd.s32 %v569, 127
      %v571 = vshll.u32 %v570, 23
      %v572 = vor.u32 4788187, %v571
      %v573 = vand.u32 2147483647, %v572
      %v575 = vcvt.s32.f32 %v568
      %v576 = vmul.f32 %v575, %v573
      %v577 = vxor.u32 %v576, 2147483648
      %v578 = vsel %vm495, %v577, %v576
      %v579 = vsub.s32 4, %v555
      %v580 = vsel %vm495, %v579, %v555
      %v581 = vsel %vm494, %v374, %v578
      %v582 = vsel %vm494, 0, %v580
      %v583 = vcosq.f32.pop %v581
      %v584 = vsinq.f32.pop %v581
      %vm585 = vweird.f32 %v374
      %v586 = vadd.s32 %v582, 3
      %v587 = vand.u32 %v586, 3
      %vm588 = vcmp.lt.s32.totalorder %v587, 2
      %vm589 = vcmp.eq.s32.totalorder %v587, 0
      %v590 = vxor.u32 %v584, 2147483648
      %v591 = vsel %vm589, %v583, %v590
      %vm592 = vcmp.eq.s32.totalorder %v587, 2
      %v593 = vxor.u32 %v583, 2147483648
      %v594 = vsel %vm592, %v593, %v584
      %v595 = vsel %vm588, %v591, %v594
      %v596 = vsel %vm585, nan, %v595
      %v597 = vand.u32 2147483647, %v375
      %vm598 = vcmp.le.f32.partialorder %v597, 0.7853982
      %vm599 = vcmp.lt.s32.totalorder %v375, 0
      %v600 = vand.u32 %v375, 2139095040
      %v601 = vshrl.u32 %v600, 23
      %v602 = vsub.s32 %v601, 127
      %v603 = vand.u32 2147483647, %v375
      %v604 = vand.u32 %v603, 8388607
      %v605 = vor.u32 %v604, 8388608
      %v606 = vsub.s32 0, %v605
      %v607 = vadd.s32 %v602, 1
      %vm608 = vcmp.gt.s32.totalorder %v607, 0
      %v609 = vsel %vm608, %v607, 0
      %v610 = vshrl.u32 %v609, 5
      %v611 = vand.u32 %v609, 31
      %v612 = vsub.s32 32, %v611
      %v613 = vshrl.u32 683565275, %v612
      %v614 = vshll.u32 683565275, %v611
      %v615 = vshrl.u32 2475754826, %v612
      %v616 = vor.u32 %v614, %v615
      %v617 = vshll.u32 2475754826, %v611
      %v618 = vshrl.u32 2131351028, %v612
      %v619 = vor.u32 %v617, %v618
      %v620 = vshll.u32 2131351028, %v611
      %v621 = vshrl.u32 2102212464, %v612
      %v622 = vor.u32 %v620, %v621
      %v623 = vshll.u32 2102212464, %v611
      %v624 = vshrl.u32 920167782, %v612
      %v625 = vor.u32 %v623, %v624
      %v626 = vshll.u32 920167782, %v611
      %v627 = vshrl.u32 1326507024, %v612
      %v628 = vor.u32 %v626, %v627
      %vm629 = vcmp.lt.s32.totalorder %v610, 1
      %vm630 = vcmp.lt.s32.totalorder %v610, 2
      %vm631 = vcmp.lt.s32.totalorder %v610, 3
      %vm632 = vcmp.lt.s32.totalorder %v610, 4
      %v633 = vsel %vm629, %v613, %v616
      %v634 = vsel %vm632, %v622, 2102212464
      %v635 = vsel %vm631, %v619, %v634
      %v636 = vsel %vm630, %v633, %v635
      %v637 = vsel %vm629, %v616, %v619
      %v638 = vsel %vm632, %v625, 920167782
      %v639 = vsel %vm631, %v622, %v638
      %v640 = vsel %vm630, %v637, %v639
      %v641 = vsel %vm629, %v619, %v622
      %v642 = vsel %vm632, %v628, 1326507024
      %v643 = vsel %vm631, %v625, %v642
      %v644 = vsel %vm630, %v641, %v643
      %v645 = vshll.u32 %v605, 8
      %v646 = vmul.u32.u64.compose %v645, %v644
      %v647 = vextract.low.u32 %v646
      %v648 = vextract.high.u32 %v646
      %v649 = vmul.u32.u64.compose %v645, %v640
      %v650 = vextract.low.u32 %v649
      %v651 = vextract.high.u32 %v649
      %v652 = vmul.u32 %v645, %v636
      %v653 = vadd.s32 %v648, %v650
      %vm654 = vc.u32 %v648, %v650
      %v655 = vadd.s32 %v651, 1
      %v656 = vsel %vm654, %v655, %v651
      %v657 = vadd.s32 %v652, %v656
      %v658 = vadd.s32 %v657, 536870912
      %v659 = vshrl.u32 %v658, 30
      %v660 = vshll.u32 %v659, 30
      %v661 = vsub.s32 %v657, %v660
      %vm662 = vcmp.lt.s32.totalorder %v661, 0
      %v663 = vsub.s32 0, %v661
      %v664 = vsel %vm662, %v663, %v661
      %v665 = vclz %v664
      %v666 = vsub.s32 %v665, 2
      %vm667 = vcmp.gt.s32.totalorder 0, %v666
      %v668 = vsel %vm667, 0, %v666
      %v669 = vsub.s32 32, %v668
      %v670 = vshll.u32 %v661, %v668
      %v671 = vshrl.u32 %v653, %v669
      %v672 = vor.u32 %v670, %v671
      %v673 = vsub.s32 4294967266, %v668
      %v674 = vadd.s32 %v673, 127
      %v675 = vshll.u32 %v674, 23
      %v676 = vor.u32 4788187, %v675
      %v677 = vand.u32 2147483647, %v676
      %v679 = vcvt.s32.f32 %v672
      %v680 = vmul.f32 %v679, %v677
      %v681 = vxor.u32 %v680, 2147483648
      %v682 = vsel %vm599, %v681, %v680
      %v683 = vsub.s32 4, %v659
      %v684 = vsel %vm599, %v683, %v659
      %v685 = vsel %vm598, %v375, %v682
      %v686 = vsel %vm598, 0, %v684
      %v687 = vcosq.f32.pop %v685
      %v688 = vsinq.f32.pop %v685
      %vm689 = vweird.f32 %v375
      %v690 = vadd.s32 %v686, 3
      %v691 = vand.u32 %v690, 3
      %vm692 = vcmp.lt.s32.totalorder %v691, 2
      %vm693 = vcmp.eq.s32.totalorder %v691, 0
      %v694 = vxor.u32 %v688, 2147483648
      %v695 = vsel %vm693, %v687, %v694
      %vm696 = vcmp.eq.s32.totalorder %v691, 2
      %v697 = vxor.u32 %v687, 2147483648
      %v698 = vsel %vm696, %v697, %v688
      %v699 = vsel %vm692, %v695, %v698
      %v700 = vsel %vm689, nan, %v699
      %v701 = vand.u32 2147483647, %v376
      %vm702 = vcmp.le.f32.partialorder %v701, 0.7853982
      %vm703 = vcmp.lt.s32.totalorder %v376, 0
      %v704 = vand.u32 %v376, 2139095040
      %v705 = vshrl.u32 %v704, 23
      %v706 = vsub.s32 %v705, 127
      %v707 = vand.u32 2147483647, %v376
      %v708 = vand.u32 %v707, 8388607
      %v709 = vor.u32 %v708, 8388608
      %v710 = vsub.s32 0, %v709
      %v711 = vadd.s32 %v706, 1
      %vm712 = vcmp.gt.s32.totalorder %v711, 0
      %v713 = vsel %vm712, %v711, 0
      %v714 = vshrl.u32 %v713, 5
      %v715 = vand.u32 %v713, 31
      %v716 = vsub.s32 32, %v715
      %v717 = vshrl.u32 683565275, %v716
      %v718 = vshll.u32 683565275, %v715
      %v719 = vshrl.u32 2475754826, %v716
      %v720 = vor.u32 %v718, %v719
      %v721 = vshll.u32 2475754826, %v715
      %v722 = vshrl.u32 2131351028, %v716
      %v723 = vor.u32 %v721, %v722
      %v724 = vshll.u32 2131351028, %v715
      %v725 = vshrl.u32 2102212464, %v716
      %v726 = vor.u32 %v724, %v725
      %v727 = vshll.u32 2102212464, %v715
      %v728 = vshrl.u32 920167782, %v716
      %v729 = vor.u32 %v727, %v728
      %v730 = vshll.u32 920167782, %v715
      %v731 = vshrl.u32 1326507024, %v716
      %v732 = vor.u32 %v730, %v731
      %vm733 = vcmp.lt.s32.totalorder %v714, 1
      %vm734 = vcmp.lt.s32.totalorder %v714, 2
      %vm735 = vcmp.lt.s32.totalorder %v714, 3
      %vm736 = vcmp.lt.s32.totalorder %v714, 4
      %v737 = vsel %vm733, %v717, %v720
      %v738 = vsel %vm736, %v726, 2102212464
      %v739 = vsel %vm735, %v723, %v738
      %v740 = vsel %vm734, %v737, %v739
      %v741 = vsel %vm733, %v720, %v723
      %v742 = vsel %vm736, %v729, 920167782
      %v743 = vsel %vm735, %v726, %v742
      %v744 = vsel %vm734, %v741, %v743
      %v745 = vsel %vm733, %v723, %v726
      %v746 = vsel %vm736, %v732, 1326507024
      %v747 = vsel %vm735, %v729, %v746
      %v748 = vsel %vm734, %v745, %v747
      %v749 = vshll.u32 %v709, 8
      %v750 = vmul.u32.u64.compose %v749, %v748
      %v751 = vextract.low.u32 %v750
      %v752 = vextract.high.u32 %v750
      %v753 = vmul.u32.u64.compose %v749, %v744
      %v754 = vextract.low.u32 %v753
      %v755 = vextract.high.u32 %v753
      %v756 = vmul.u32 %v749, %v740
      %v757 = vadd.s32 %v752, %v754
      %vm758 = vc.u32 %v752, %v754
      %v759 = vadd.s32 %v755, 1
      %v760 = vsel %vm758, %v759, %v755
      %v761 = vadd.s32 %v756, %v760
      %v762 = vadd.s32 %v761, 536870912
      %v763 = vshrl.u32 %v762, 30
      %v764 = vshll.u32 %v763, 30
      %v765 = vsub.s32 %v761, %v764
      %vm766 = vcmp.lt.s32.totalorder %v765, 0
      %v767 = vsub.s32 0, %v765
      %v768 = vsel %vm766, %v767, %v765
      %v769 = vclz %v768
      %v770 = vsub.s32 %v769, 2
      %vm771 = vcmp.gt.s32.totalorder 0, %v770
      %v772 = vsel %vm771, 0, %v770
      %v773 = vsub.s32 32, %v772
      %v774 = vshll.u32 %v765, %v772
      %v775 = vshrl.u32 %v757, %v773
      %v776 = vor.u32 %v774, %v775
      %v777 = vsub.s32 4294967266, %v772
      %v778 = vadd.s32 %v777, 127
      %v779 = vshll.u32 %v778, 23
      %v780 = vor.u32 4788187, %v779
      %v781 = vand.u32 2147483647, %v780
      %v783 = vcvt.s32.f32 %v776
      %v784 = vmul.f32 %v783, %v781
      %v785 = vxor.u32 %v784, 2147483648
      %v786 = vsel %vm703, %v785, %v784
      %v787 = vsub.s32 4, %v763
      %v788 = vsel %vm703, %v787, %v763
      %v789 = vsel %vm702, %v376, %v786
      %v790 = vsel %vm702, 0, %v788
      %v791 = vcosq.f32.pop %v789
      %v792 = vsinq.f32.pop %v789
      %vm793 = vweird.f32 %v376
      %v794 = vadd.s32 %v790, 3
      %v795 = vand.u32 %v794, 3
      %vm796 = vcmp.lt.s32.totalorder %v795, 2
      %vm797 = vcmp.eq.s32.totalorder %v795, 0
      %v798 = vxor.u32 %v792, 2147483648
      %v799 = vsel %vm797, %v791, %v798
      %vm800 = vcmp.eq.s32.totalorder %v795, 2
      %v801 = vxor.u32 %v791, 2147483648
      %v802 = vsel %vm800, %v801, %v792
      %v803 = vsel %vm796, %v799, %v802
      %v804 = vsel %vm793, nan, %v803
      %v805 = vand.u32 2147483647, %v377
      %vm806 = vcmp.le.f32.partialorder %v805, 0.7853982
      %vm807 = vcmp.lt.s32.totalorder %v377, 0
      %v808 = vand.u32 %v377, 2139095040
      %v809 = vshrl.u32 %v808, 23
      %v810 = vsub.s32 %v809, 127
      %v811 = vand.u32 2147483647, %v377
      %v812 = vand.u32 %v811, 8388607
      %v813 = vor.u32 %v812, 8388608
      %v814 = vsub.s32 0, %v813
      %v815 = vadd.s32 %v810, 1
      %vm816 = vcmp.gt.s32.totalorder %v815, 0
      %v817 = vsel %vm816, %v815, 0
      %v818 = vshrl.u32 %v817, 5
      %v819 = vand.u32 %v817, 31
      %v820 = vsub.s32 32, %v819
      %v821 = vshrl.u32 683565275, %v820
      %v822 = vshll.u32 683565275, %v819
      %v823 = vshrl.u32 2475754826, %v820
      %v824 = vor.u32 %v822, %v823
      %v825 = vshll.u32 2475754826, %v819
      %v826 = vshrl.u32 2131351028, %v820
      %v827 = vor.u32 %v825, %v826
      %v828 = vshll.u32 2131351028, %v819
      %v829 = vshrl.u32 2102212464, %v820
      %v830 = vor.u32 %v828, %v829
      %v831 = vshll.u32 2102212464, %v819
      %v832 = vshrl.u32 920167782, %v820
      %v833 = vor.u32 %v831, %v832
      %v834 = vshll.u32 920167782, %v819
      %v835 = vshrl.u32 1326507024, %v820
      %v836 = vor.u32 %v834, %v835
      %vm837 = vcmp.lt.s32.totalorder %v818, 1
      %vm838 = vcmp.lt.s32.totalorder %v818, 2
      %vm839 = vcmp.lt.s32.totalorder %v818, 3
      %vm840 = vcmp.lt.s32.totalorder %v818, 4
      %v841 = vsel %vm837, %v821, %v824
      %v842 = vsel %vm840, %v830, 2102212464
      %v843 = vsel %vm839, %v827, %v842
      %v844 = vsel %vm838, %v841, %v843
      %v845 = vsel %vm837, %v824, %v827
      %v846 = vsel %vm840, %v833, 920167782
      %v847 = vsel %vm839, %v830, %v846
      %v848 = vsel %vm838, %v845, %v847
      %v849 = vsel %vm837, %v827, %v830
      %v850 = vsel %vm840, %v836, 1326507024
      %v851 = vsel %vm839, %v833, %v850
      %v852 = vsel %vm838, %v849, %v851
      %v853 = vshll.u32 %v813, 8
      %v854 = vmul.u32.u64.compose %v853, %v852
      %v855 = vextract.low.u32 %v854
      %v856 = vextract.high.u32 %v854
      %v857 = vmul.u32.u64.compose %v853, %v848
      %v858 = vextract.low.u32 %v857
      %v859 = vextract.high.u32 %v857
      %v860 = vmul.u32 %v853, %v844
      %v861 = vadd.s32 %v856, %v858
      %vm862 = vc.u32 %v856, %v858
      %v863 = vadd.s32 %v859, 1
      %v864 = vsel %vm862, %v863, %v859
      %v865 = vadd.s32 %v860, %v864
      %v866 = vadd.s32 %v865, 536870912
      %v867 = vshrl.u32 %v866, 30
      %v868 = vshll.u32 %v867, 30
      %v869 = vsub.s32 %v865, %v868
      %vm870 = vcmp.lt.s32.totalorder %v869, 0
      %v871 = vsub.s32 0, %v869
      %v872 = vsel %vm870, %v871, %v869
      %v873 = vclz %v872
      %v874 = vsub.s32 %v873, 2
      %vm875 = vcmp.gt.s32.totalorder 0, %v874
      %v876 = vsel %vm875, 0, %v874
      %v877 = vsub.s32 32, %v876
      %v878 = vshll.u32 %v869, %v876
      %v879 = vshrl.u32 %v861, %v877
      %v880 = vor.u32 %v878, %v879
      %v881 = vsub.s32 4294967266, %v876
      %v882 = vadd.s32 %v881, 127
      %v883 = vshll.u32 %v882, 23
      %v884 = vor.u32 4788187, %v883
      %v885 = vand.u32 2147483647, %v884
      %v887 = vcvt.s32.f32 %v880
      %v888 = vmul.f32 %v887, %v885
      %v889 = vxor.u32 %v888, 2147483648
      %v890 = vsel %vm807, %v889, %v888
      %v891 = vsub.s32 4, %v867
      %v892 = vsel %vm807, %v891, %v867
      %v893 = vsel %vm806, %v377, %v890
      %v894 = vsel %vm806, 0, %v892
      %v895 = vcosq.f32.pop %v893
      %v896 = vsinq.f32.pop %v893
      %vm897 = vweird.f32 %v377
      %v898 = vadd.s32 %v894, 3
      %v899 = vand.u32 %v898, 3
      %vm900 = vcmp.lt.s32.totalorder %v899, 2
      %vm901 = vcmp.eq.s32.totalorder %v899, 0
      %v902 = vxor.u32 %v896, 2147483648
      %v903 = vsel %vm901, %v895, %v902
      %vm904 = vcmp.eq.s32.totalorder %v899, 2
      %v905 = vxor.u32 %v895, 2147483648
      %v906 = vsel %vm904, %v905, %v896
      %v907 = vsel %vm900, %v903, %v906
      %v908 = vsel %vm897, nan, %v907
      %v909 = vand.u32 2147483647, %v378
      %vm910 = vcmp.le.f32.partialorder %v909, 0.7853982
      %vm911 = vcmp.lt.s32.totalorder %v378, 0
      %v912 = vand.u32 %v378, 2139095040
      %v913 = vshrl.u32 %v912, 23
      %v914 = vsub.s32 %v913, 127
      %v915 = vand.u32 2147483647, %v378
      %v916 = vand.u32 %v915, 8388607
      %v917 = vor.u32 %v916, 8388608
      %v918 = vsub.s32 0, %v917
      %v919 = vadd.s32 %v914, 1
      %vm920 = vcmp.gt.s32.totalorder %v919, 0
      %v921 = vsel %vm920, %v919, 0
      %v922 = vshrl.u32 %v921, 5
      %v923 = vand.u32 %v921, 31
      %v924 = vsub.s32 32, %v923
      %v925 = vshrl.u32 683565275, %v924
      %v926 = vshll.u32 683565275, %v923
      %v927 = vshrl.u32 2475754826, %v924
      %v928 = vor.u32 %v926, %v927
      %v929 = vshll.u32 2475754826, %v923
      %v930 = vshrl.u32 2131351028, %v924
      %v931 = vor.u32 %v929, %v930
      %v932 = vshll.u32 2131351028, %v923
      %v933 = vshrl.u32 2102212464, %v924
      %v934 = vor.u32 %v932, %v933
      %v935 = vshll.u32 2102212464, %v923
      %v936 = vshrl.u32 920167782, %v924
      %v937 = vor.u32 %v935, %v936
      %v938 = vshll.u32 920167782, %v923
      %v939 = vshrl.u32 1326507024, %v924
      %v940 = vor.u32 %v938, %v939
      %vm941 = vcmp.lt.s32.totalorder %v922, 1
      %vm942 = vcmp.lt.s32.totalorder %v922, 2
      %vm943 = vcmp.lt.s32.totalorder %v922, 3
      %vm944 = vcmp.lt.s32.totalorder %v922, 4
      %v945 = vsel %vm941, %v925, %v928
      %v946 = vsel %vm944, %v934, 2102212464
      %v947 = vsel %vm943, %v931, %v946
      %v948 = vsel %vm942, %v945, %v947
      %v949 = vsel %vm941, %v928, %v931
      %v950 = vsel %vm944, %v937, 920167782
      %v951 = vsel %vm943, %v934, %v950
      %v952 = vsel %vm942, %v949, %v951
      %v953 = vsel %vm941, %v931, %v934
      %v954 = vsel %vm944, %v940, 1326507024
      %v955 = vsel %vm943, %v937, %v954
      %v956 = vsel %vm942, %v953, %v955
      %v957 = vshll.u32 %v917, 8
      %v958 = vmul.u32.u64.compose %v957, %v956
      %v959 = vextract.low.u32 %v958
      %v960 = vextract.high.u32 %v958
      %v961 = vmul.u32.u64.compose %v957, %v952
      %v962 = vextract.low.u32 %v961
      %v963 = vextract.high.u32 %v961
      %v964 = vmul.u32 %v957, %v948
      %v965 = vadd.s32 %v960, %v962
      %vm966 = vc.u32 %v960, %v962
      %v967 = vadd.s32 %v963, 1
      %v968 = vsel %vm966, %v967, %v963
      %v969 = vadd.s32 %v964, %v968
      %v970 = vadd.s32 %v969, 536870912
      %v971 = vshrl.u32 %v970, 30
      %v972 = vshll.u32 %v971, 30
      %v973 = vsub.s32 %v969, %v972
      %vm974 = vcmp.lt.s32.totalorder %v973, 0
      %v975 = vsub.s32 0, %v973
      %v976 = vsel %vm974, %v975, %v973
      %v977 = vclz %v976
      %v978 = vsub.s32 %v977, 2
      %vm979 = vcmp.gt.s32.totalorder 0, %v978
      %v980 = vsel %vm979, 0, %v978
      %v981 = vsub.s32 32, %v980
      %v982 = vshll.u32 %v973, %v980
      %v983 = vshrl.u32 %v965, %v981
      %v984 = vor.u32 %v982, %v983
      %v985 = vsub.s32 4294967266, %v980
      %v986 = vadd.s32 %v985, 127
      %v987 = vshll.u32 %v986, 23
      %v988 = vor.u32 4788187, %v987
      %v989 = vand.u32 2147483647, %v988
      %v991 = vcvt.s32.f32 %v984
      %v992 = vmul.f32 %v991, %v989
      %v993 = vxor.u32 %v992, 2147483648
      %v994 = vsel %vm911, %v993, %v992
      %v995 = vsub.s32 4, %v971
      %v996 = vsel %vm911, %v995, %v971
      %v997 = vsel %vm910, %v378, %v994
      %v998 = vsel %vm910, 0, %v996
      %v999 = vcosq.f32.pop %v997
      %v1000 = vsinq.f32.pop %v997
      %vm1001 = vweird.f32 %v378
      %v1002 = vadd.s32 %v998, 3
      %v1003 = vand.u32 %v1002, 3
      %vm1004 = vcmp.lt.s32.totalorder %v1003, 2
      %vm1005 = vcmp.eq.s32.totalorder %v1003, 0
      %v1006 = vxor.u32 %v1000, 2147483648
      %v1007 = vsel %vm1005, %v999, %v1006
      %vm1008 = vcmp.eq.s32.totalorder %v1003, 2
      %v1009 = vxor.u32 %v999, 2147483648
      %v1010 = vsel %vm1008, %v1009, %v1000
      %v1011 = vsel %vm1004, %v1007, %v1010
      %v1012 = vsel %vm1001, nan, %v1011
      %v1013 = vand.u32 2147483647, %v379
      %vm1014 = vcmp.le.f32.partialorder %v1013, 0.7853982
      %vm1015 = vcmp.lt.s32.totalorder %v379, 0
      %v1016 = vand.u32 %v379, 2139095040
      %v1017 = vshrl.u32 %v1016, 23
      %v1018 = vsub.s32 %v1017, 127
      %v1019 = vand.u32 2147483647, %v379
      %v1020 = vand.u32 %v1019, 8388607
      %v1021 = vor.u32 %v1020, 8388608
      %v1022 = vsub.s32 0, %v1021
      %v1023 = vadd.s32 %v1018, 1
      %vm1024 = vcmp.gt.s32.totalorder %v1023, 0
      %v1025 = vsel %vm1024, %v1023, 0
      %v1026 = vshrl.u32 %v1025, 5
      %v1027 = vand.u32 %v1025, 31
      %v1028 = vsub.s32 32, %v1027
      %v1029 = vshrl.u32 683565275, %v1028
      %v1030 = vshll.u32 683565275, %v1027
      %v1031 = vshrl.u32 2475754826, %v1028
      %v1032 = vor.u32 %v1030, %v1031
      %v1033 = vshll.u32 2475754826, %v1027
      %v1034 = vshrl.u32 2131351028, %v1028
      %v1035 = vor.u32 %v1033, %v1034
      %v1036 = vshll.u32 2131351028, %v1027
      %v1037 = vshrl.u32 2102212464, %v1028
      %v1038 = vor.u32 %v1036, %v1037
      %v1039 = vshll.u32 2102212464, %v1027
      %v1040 = vshrl.u32 920167782, %v1028
      %v1041 = vor.u32 %v1039, %v1040
      %v1042 = vshll.u32 920167782, %v1027
      %v1043 = vshrl.u32 1326507024, %v1028
      %v1044 = vor.u32 %v1042, %v1043
      %vm1045 = vcmp.lt.s32.totalorder %v1026, 1
      %vm1046 = vcmp.lt.s32.totalorder %v1026, 2
      %vm1047 = vcmp.lt.s32.totalorder %v1026, 3
      %vm1048 = vcmp.lt.s32.totalorder %v1026, 4
      %v1049 = vsel %vm1045, %v1029, %v1032
      %v1050 = vsel %vm1048, %v1038, 2102212464
      %v1051 = vsel %vm1047, %v1035, %v1050
      %v1052 = vsel %vm1046, %v1049, %v1051
      %v1053 = vsel %vm1045, %v1032, %v1035
      %v1054 = vsel %vm1048, %v1041, 920167782
      %v1055 = vsel %vm1047, %v1038, %v1054
      %v1056 = vsel %vm1046, %v1053, %v1055
      %v1057 = vsel %vm1045, %v1035, %v1038
      %v1058 = vsel %vm1048, %v1044, 1326507024
      %v1059 = vsel %vm1047, %v1041, %v1058
      %v1060 = vsel %vm1046, %v1057, %v1059
      %v1061 = vshll.u32 %v1021, 8
      %v1062 = vmul.u32.u64.compose %v1061, %v1060
      %v1063 = vextract.low.u32 %v1062
      %v1064 = vextract.high.u32 %v1062
      %v1065 = vmul.u32.u64.compose %v1061, %v1056
      %v1066 = vextract.low.u32 %v1065
      %v1067 = vextract.high.u32 %v1065
      %v1068 = vmul.u32 %v1061, %v1052
      %v1069 = vadd.s32 %v1064, %v1066
      %vm1070 = vc.u32 %v1064, %v1066
      %v1071 = vadd.s32 %v1067, 1
      %v1072 = vsel %vm1070, %v1071, %v1067
      %v1073 = vadd.s32 %v1068, %v1072
      %v1074 = vadd.s32 %v1073, 536870912
      %v1075 = vshrl.u32 %v1074, 30
      %v1076 = vshll.u32 %v1075, 30
      %v1077 = vsub.s32 %v1073, %v1076
      %vm1078 = vcmp.lt.s32.totalorder %v1077, 0
      %v1079 = vsub.s32 0, %v1077
      %v1080 = vsel %vm1078, %v1079, %v1077
      %v1081 = vclz %v1080
      %v1082 = vsub.s32 %v1081, 2
      %vm1083 = vcmp.gt.s32.totalorder 0, %v1082
      %v1084 = vsel %vm1083, 0, %v1082
      %v1085 = vsub.s32 32, %v1084
      %v1086 = vshll.u32 %v1077, %v1084
      %v1087 = vshrl.u32 %v1069, %v1085
      %v1088 = vor.u32 %v1086, %v1087
      %v1089 = vsub.s32 4294967266, %v1084
      %v1090 = vadd.s32 %v1089, 127
      %v1091 = vshll.u32 %v1090, 23
      %v1092 = vor.u32 4788187, %v1091
      %v1093 = vand.u32 2147483647, %v1092
      %v1095 = vcvt.s32.f32 %v1088
      %v1096 = vmul.f32 %v1095, %v1093
      %v1097 = vxor.u32 %v1096, 2147483648
      %v1098 = vsel %vm1015, %v1097, %v1096
      %v1099 = vsub.s32 4, %v1075
      %v1100 = vsel %vm1015, %v1099, %v1075
      %v1101 = vsel %vm1014, %v379, %v1098
      %v1102 = vsel %vm1014, 0, %v1100
      %v1103 = vcosq.f32.pop %v1101
      %v1104 = vsinq.f32.pop %v1101
      %vm1105 = vweird.f32 %v379
      %v1106 = vadd.s32 %v1102, 3
      %v1107 = vand.u32 %v1106, 3
      %vm1108 = vcmp.lt.s32.totalorder %v1107, 2
      %vm1109 = vcmp.eq.s32.totalorder %v1107, 0
      %v1110 = vxor.u32 %v1104, 2147483648
      %v1111 = vsel %vm1109, %v1103, %v1110
      %vm1112 = vcmp.eq.s32.totalorder %v1107, 2
      %v1113 = vxor.u32 %v1103, 2147483648
      %v1114 = vsel %vm1112, %v1113, %v1104
      %v1115 = vsel %vm1108, %v1111, %v1114
      %v1116 = vsel %vm1105, nan, %v1115
      %v1117 = vand.u32 2147483647, %v380
      %vm1118 = vcmp.le.f32.partialorder %v1117, 0.7853982
      %vm1119 = vcmp.lt.s32.totalorder %v380, 0
      %v1120 = vand.u32 %v380, 2139095040
      %v1121 = vshrl.u32 %v1120, 23
      %v1122 = vsub.s32 %v1121, 127
      %v1123 = vand.u32 2147483647, %v380
      %v1124 = vand.u32 %v1123, 8388607
      %v1125 = vor.u32 %v1124, 8388608
      %v1126 = vsub.s32 0, %v1125
      %v1127 = vadd.s32 %v1122, 1
      %vm1128 = vcmp.gt.s32.totalorder %v1127, 0
      %v1129 = vsel %vm1128, %v1127, 0
      %v1130 = vshrl.u32 %v1129, 5
      %v1131 = vand.u32 %v1129, 31
      %v1132 = vsub.s32 32, %v1131
      %v1133 = vshrl.u32 683565275, %v1132
      %v1134 = vshll.u32 683565275, %v1131
      %v1135 = vshrl.u32 2475754826, %v1132
      %v1136 = vor.u32 %v1134, %v1135
      %v1137 = vshll.u32 2475754826, %v1131
      %v1138 = vshrl.u32 2131351028, %v1132
      %v1139 = vor.u32 %v1137, %v1138
      %v1140 = vshll.u32 2131351028, %v1131
      %v1141 = vshrl.u32 2102212464, %v1132
      %v1142 = vor.u32 %v1140, %v1141
      %v1143 = vshll.u32 2102212464, %v1131
      %v1144 = vshrl.u32 920167782, %v1132
      %v1145 = vor.u32 %v1143, %v1144
      %v1146 = vshll.u32 920167782, %v1131
      %v1147 = vshrl.u32 1326507024, %v1132
      %v1148 = vor.u32 %v1146, %v1147
      %vm1149 = vcmp.lt.s32.totalorder %v1130, 1
      %vm1150 = vcmp.lt.s32.totalorder %v1130, 2
      %vm1151 = vcmp.lt.s32.totalorder %v1130, 3
      %vm1152 = vcmp.lt.s32.totalorder %v1130, 4
      %v1153 = vsel %vm1149, %v1133, %v1136
      %v1154 = vsel %vm1152, %v1142, 2102212464
      %v1155 = vsel %vm1151, %v1139, %v1154
      %v1156 = vsel %vm1150, %v1153, %v1155
      %v1157 = vsel %vm1149, %v1136, %v1139
      %v1158 = vsel %vm1152, %v1145, 920167782
      %v1159 = vsel %vm1151, %v1142, %v1158
      %v1160 = vsel %vm1150, %v1157, %v1159
      %v1161 = vsel %vm1149, %v1139, %v1142
      %v1162 = vsel %vm1152, %v1148, 1326507024
      %v1163 = vsel %vm1151, %v1145, %v1162
      %v1164 = vsel %vm1150, %v1161, %v1163
      %v1165 = vshll.u32 %v1125, 8
      %v1166 = vmul.u32.u64.compose %v1165, %v1164
      %v1167 = vextract.low.u32 %v1166
      %v1168 = vextract.high.u32 %v1166
      %v1169 = vmul.u32.u64.compose %v1165, %v1160
      %v1170 = vextract.low.u32 %v1169
      %v1171 = vextract.high.u32 %v1169
      %v1172 = vmul.u32 %v1165, %v1156
      %v1173 = vadd.s32 %v1168, %v1170
      %vm1174 = vc.u32 %v1168, %v1170
      %v1175 = vadd.s32 %v1171, 1
      %v1176 = vsel %vm1174, %v1175, %v1171
      %v1177 = vadd.s32 %v1172, %v1176
      %v1178 = vadd.s32 %v1177, 536870912
      %v1179 = vshrl.u32 %v1178, 30
      %v1180 = vshll.u32 %v1179, 30
      %v1181 = vsub.s32 %v1177, %v1180
      %vm1182 = vcmp.lt.s32.totalorder %v1181, 0
      %v1183 = vsub.s32 0, %v1181
      %v1184 = vsel %vm1182, %v1183, %v1181
      %v1185 = vclz %v1184
      %v1186 = vsub.s32 %v1185, 2
      %vm1187 = vcmp.gt.s32.totalorder 0, %v1186
      %v1188 = vsel %vm1187, 0, %v1186
      %v1189 = vsub.s32 32, %v1188
      %v1190 = vshll.u32 %v1181, %v1188
      %v1191 = vshrl.u32 %v1173, %v1189
      %v1192 = vor.u32 %v1190, %v1191
      %v1193 = vsub.s32 4294967266, %v1188
      %v1194 = vadd.s32 %v1193, 127
      %v1195 = vshll.u32 %v1194, 23
      %v1196 = vor.u32 4788187, %v1195
      %v1197 = vand.u32 2147483647, %v1196
      %v1199 = vcvt.s32.f32 %v1192
      %v1200 = vmul.f32 %v1199, %v1197
      %v1201 = vxor.u32 %v1200, 2147483648
      %v1202 = vsel %vm1119, %v1201, %v1200
      %v1203 = vsub.s32 4, %v1179
      %v1204 = vsel %vm1119, %v1203, %v1179
      %v1205 = vsel %vm1118, %v380, %v1202
      %v1206 = vsel %vm1118, 0, %v1204
      %v1207 = vcosq.f32.pop %v1205
      %v1208 = vsinq.f32.pop %v1205
      %vm1209 = vweird.f32 %v380
      %v1210 = vadd.s32 %v1206, 3
      %v1211 = vand.u32 %v1210, 3
      %vm1212 = vcmp.lt.s32.totalorder %v1211, 2
      %vm1213 = vcmp.eq.s32.totalorder %v1211, 0
      %v1214 = vxor.u32 %v1208, 2147483648
      %v1215 = vsel %vm1213, %v1207, %v1214
      %vm1216 = vcmp.eq.s32.totalorder %v1211, 2
      %v1217 = vxor.u32 %v1207, 2147483648
      %v1218 = vsel %vm1216, %v1217, %v1208
      %v1219 = vsel %vm1212, %v1215, %v1218
      %v1220 = vsel %vm1209, nan, %v1219
      %v1221 = vand.u32 2147483647, %v381
      %vm1222 = vcmp.le.f32.partialorder %v1221, 0.7853982
      %vm1223 = vcmp.lt.s32.totalorder %v381, 0
      %v1224 = vand.u32 %v381, 2139095040
      %v1225 = vshrl.u32 %v1224, 23
      %v1226 = vsub.s32 %v1225, 127
      %v1227 = vand.u32 2147483647, %v381
      %v1228 = vand.u32 %v1227, 8388607
      %v1229 = vor.u32 %v1228, 8388608
      %v1230 = vsub.s32 0, %v1229
      %v1231 = vadd.s32 %v1226, 1
      %vm1232 = vcmp.gt.s32.totalorder %v1231, 0
      %v1233 = vsel %vm1232, %v1231, 0
      %v1234 = vshrl.u32 %v1233, 5
      %v1235 = vand.u32 %v1233, 31
      %v1236 = vsub.s32 32, %v1235
      %v1237 = vshrl.u32 683565275, %v1236
      %v1238 = vshll.u32 683565275, %v1235
      %v1239 = vshrl.u32 2475754826, %v1236
      %v1240 = vor.u32 %v1238, %v1239
      %v1241 = vshll.u32 2475754826, %v1235
      %v1242 = vshrl.u32 2131351028, %v1236
      %v1243 = vor.u32 %v1241, %v1242
      %v1244 = vshll.u32 2131351028, %v1235
      %v1245 = vshrl.u32 2102212464, %v1236
      %v1246 = vor.u32 %v1244, %v1245
      %v1247 = vshll.u32 2102212464, %v1235
      %v1248 = vshrl.u32 920167782, %v1236
      %v1249 = vor.u32 %v1247, %v1248
      %v1250 = vshll.u32 920167782, %v1235
      %v1251 = vshrl.u32 1326507024, %v1236
      %v1252 = vor.u32 %v1250, %v1251
      %vm1253 = vcmp.lt.s32.totalorder %v1234, 1
      %vm1254 = vcmp.lt.s32.totalorder %v1234, 2
      %vm1255 = vcmp.lt.s32.totalorder %v1234, 3
      %vm1256 = vcmp.lt.s32.totalorder %v1234, 4
      %v1257 = vsel %vm1253, %v1237, %v1240
      %v1258 = vsel %vm1256, %v1246, 2102212464
      %v1259 = vsel %vm1255, %v1243, %v1258
      %v1260 = vsel %vm1254, %v1257, %v1259
      %v1261 = vsel %vm1253, %v1240, %v1243
      %v1262 = vsel %vm1256, %v1249, 920167782
      %v1263 = vsel %vm1255, %v1246, %v1262
      %v1264 = vsel %vm1254, %v1261, %v1263
      %v1265 = vsel %vm1253, %v1243, %v1246
      %v1266 = vsel %vm1256, %v1252, 1326507024
      %v1267 = vsel %vm1255, %v1249, %v1266
      %v1268 = vsel %vm1254, %v1265, %v1267
      %v1269 = vshll.u32 %v1229, 8
      %v1270 = vmul.u32.u64.compose %v1269, %v1268
      %v1271 = vextract.low.u32 %v1270
      %v1272 = vextract.high.u32 %v1270
      %v1273 = vmul.u32.u64.compose %v1269, %v1264
      %v1274 = vextract.low.u32 %v1273
      %v1275 = vextract.high.u32 %v1273
      %v1276 = vmul.u32 %v1269, %v1260
      %v1277 = vadd.s32 %v1272, %v1274
      %vm1278 = vc.u32 %v1272, %v1274
      %v1279 = vadd.s32 %v1275, 1
      %v1280 = vsel %vm1278, %v1279, %v1275
      %v1281 = vadd.s32 %v1276, %v1280
      %v1282 = vadd.s32 %v1281, 536870912
      %v1283 = vshrl.u32 %v1282, 30
      %v1284 = vshll.u32 %v1283, 30
      %v1285 = vsub.s32 %v1281, %v1284
      %vm1286 = vcmp.lt.s32.totalorder %v1285, 0
      %v1287 = vsub.s32 0, %v1285
      %v1288 = vsel %vm1286, %v1287, %v1285
      %v1289 = vclz %v1288
      %v1290 = vsub.s32 %v1289, 2
      %vm1291 = vcmp.gt.s32.totalorder 0, %v1290
      %v1292 = vsel %vm1291, 0, %v1290
      %v1293 = vsub.s32 32, %v1292
      %v1294 = vshll.u32 %v1285, %v1292
      %v1295 = vshrl.u32 %v1277, %v1293
      %v1296 = vor.u32 %v1294, %v1295
      %v1297 = vsub.s32 4294967266, %v1292
      %v1298 = vadd.s32 %v1297, 127
      %v1299 = vshll.u32 %v1298, 23
      %v1300 = vor.u32 4788187, %v1299
      %v1301 = vand.u32 2147483647, %v1300
      %v1303 = vcvt.s32.f32 %v1296
      %v1304 = vmul.f32 %v1303, %v1301
      %v1305 = vxor.u32 %v1304, 2147483648
      %v1306 = vsel %vm1223, %v1305, %v1304
      %v1307 = vsub.s32 4, %v1283
      %v1308 = vsel %vm1223, %v1307, %v1283
      %v1309 = vsel %vm1222, %v381, %v1306
      %v1310 = vsel %vm1222, 0, %v1308
      %v1311 = vcosq.f32.pop %v1309
      %v1312 = vsinq.f32.pop %v1309
      %vm1313 = vweird.f32 %v381
      %v1314 = vadd.s32 %v1310, 3
      %v1315 = vand.u32 %v1314, 3
      %vm1316 = vcmp.lt.s32.totalorder %v1315, 2
      %vm1317 = vcmp.eq.s32.totalorder %v1315, 0
      %v1318 = vxor.u32 %v1312, 2147483648
      %v1319 = vsel %vm1317, %v1311, %v1318
      %vm1320 = vcmp.eq.s32.totalorder %v1315, 2
      %v1321 = vxor.u32 %v1311, 2147483648
      %v1322 = vsel %vm1320, %v1321, %v1312
      %v1323 = vsel %vm1316, %v1319, %v1322
      %v1324 = vsel %vm1313, nan, %v1323
      %v1325 = vand.u32 2147483647, %v382
      %vm1326 = vcmp.le.f32.partialorder %v1325, 0.7853982
      %vm1327 = vcmp.lt.s32.totalorder %v382, 0
      %v1328 = vand.u32 %v382, 2139095040
      %v1329 = vshrl.u32 %v1328, 23
      %v1330 = vsub.s32 %v1329, 127
      %v1331 = vand.u32 2147483647, %v382
      %v1332 = vand.u32 %v1331, 8388607
      %v1333 = vor.u32 %v1332, 8388608
      %v1334 = vsub.s32 0, %v1333
      %v1335 = vadd.s32 %v1330, 1
      %vm1336 = vcmp.gt.s32.totalorder %v1335, 0
      %v1337 = vsel %vm1336, %v1335, 0
      %v1338 = vshrl.u32 %v1337, 5
      %v1339 = vand.u32 %v1337, 31
      %v1340 = vsub.s32 32, %v1339
      %v1341 = vshrl.u32 683565275, %v1340
      %v1342 = vshll.u32 683565275, %v1339
      %v1343 = vshrl.u32 2475754826, %v1340
      %v1344 = vor.u32 %v1342, %v1343
      %v1345 = vshll.u32 2475754826, %v1339
      %v1346 = vshrl.u32 2131351028, %v1340
      %v1347 = vor.u32 %v1345, %v1346
      %v1348 = vshll.u32 2131351028, %v1339
      %v1349 = vshrl.u32 2102212464, %v1340
      %v1350 = vor.u32 %v1348, %v1349
      %v1351 = vshll.u32 2102212464, %v1339
      %v1352 = vshrl.u32 920167782, %v1340
      %v1353 = vor.u32 %v1351, %v1352
      %v1354 = vshll.u32 920167782, %v1339
      %v1355 = vshrl.u32 1326507024, %v1340
      %v1356 = vor.u32 %v1354, %v1355
      %vm1357 = vcmp.lt.s32.totalorder %v1338, 1
      %vm1358 = vcmp.lt.s32.totalorder %v1338, 2
      %vm1359 = vcmp.lt.s32.totalorder %v1338, 3
      %vm1360 = vcmp.lt.s32.totalorder %v1338, 4
      %v1361 = vsel %vm1357, %v1341, %v1344
      %v1362 = vsel %vm1360, %v1350, 2102212464
      %v1363 = vsel %vm1359, %v1347, %v1362
      %v1364 = vsel %vm1358, %v1361, %v1363
      %v1365 = vsel %vm1357, %v1344, %v1347
      %v1366 = vsel %vm1360, %v1353, 920167782
      %v1367 = vsel %vm1359, %v1350, %v1366
      %v1368 = vsel %vm1358, %v1365, %v1367
      %v1369 = vsel %vm1357, %v1347, %v1350
      %v1370 = vsel %vm1360, %v1356, 1326507024
      %v1371 = vsel %vm1359, %v1353, %v1370
      %v1372 = vsel %vm1358, %v1369, %v1371
      %v1373 = vshll.u32 %v1333, 8
      %v1374 = vmul.u32.u64.compose %v1373, %v1372
      %v1375 = vextract.low.u32 %v1374
      %v1376 = vextract.high.u32 %v1374
      %v1377 = vmul.u32.u64.compose %v1373, %v1368
      %v1378 = vextract.low.u32 %v1377
      %v1379 = vextract.high.u32 %v1377
      %v1380 = vmul.u32 %v1373, %v1364
      %v1381 = vadd.s32 %v1376, %v1378
      %vm1382 = vc.u32 %v1376, %v1378
      %v1383 = vadd.s32 %v1379, 1
      %v1384 = vsel %vm1382, %v1383, %v1379
      %v1385 = vadd.s32 %v1380, %v1384
      %v1386 = vadd.s32 %v1385, 536870912
      %v1387 = vshrl.u32 %v1386, 30
      %v1388 = vshll.u32 %v1387, 30
      %v1389 = vsub.s32 %v1385, %v1388
      %vm1390 = vcmp.lt.s32.totalorder %v1389, 0
      %v1391 = vsub.s32 0, %v1389
      %v1392 = vsel %vm1390, %v1391, %v1389
      %v1393 = vclz %v1392
      %v1394 = vsub.s32 %v1393, 2
      %vm1395 = vcmp.gt.s32.totalorder 0, %v1394
      %v1396 = vsel %vm1395, 0, %v1394
      %v1397 = vsub.s32 32, %v1396
      %v1398 = vshll.u32 %v1389, %v1396
      %v1399 = vshrl.u32 %v1381, %v1397
      %v1400 = vor.u32 %v1398, %v1399
      %v1401 = vsub.s32 4294967266, %v1396
      %v1402 = vadd.s32 %v1401, 127
      %v1403 = vshll.u32 %v1402, 23
      %v1404 = vor.u32 4788187, %v1403
      %v1405 = vand.u32 2147483647, %v1404
      %v1407 = vcvt.s32.f32 %v1400
      %v1408 = vmul.f32 %v1407, %v1405
      %v1409 = vxor.u32 %v1408, 2147483648
      %v1410 = vsel %vm1327, %v1409, %v1408
      %v1411 = vsub.s32 4, %v1387
      %v1412 = vsel %vm1327, %v1411, %v1387
      %v1413 = vsel %vm1326, %v382, %v1410
      %v1414 = vsel %vm1326, 0, %v1412
      %v1415 = vcosq.f32.pop %v1413
      %v1416 = vsinq.f32.pop %v1413
      %vm1417 = vweird.f32 %v382
      %v1418 = vadd.s32 %v1414, 3
      %v1419 = vand.u32 %v1418, 3
      %vm1420 = vcmp.lt.s32.totalorder %v1419, 2
      %vm1421 = vcmp.eq.s32.totalorder %v1419, 0
      %v1422 = vxor.u32 %v1416, 2147483648
      %v1423 = vsel %vm1421, %v1415, %v1422
      %vm1424 = vcmp.eq.s32.totalorder %v1419, 2
      %v1425 = vxor.u32 %v1415, 2147483648
      %v1426 = vsel %vm1424, %v1425, %v1416
      %v1427 = vsel %vm1420, %v1423, %v1426
      %v1428 = vsel %vm1417, nan, %v1427
      %v1429 = vand.u32 2147483647, %v383
      %vm1430 = vcmp.le.f32.partialorder %v1429, 0.7853982
      %vm1431 = vcmp.lt.s32.totalorder %v383, 0
      %v1432 = vand.u32 %v383, 2139095040
      %v1433 = vshrl.u32 %v1432, 23
      %v1434 = vsub.s32 %v1433, 127
      %v1435 = vand.u32 2147483647, %v383
      %v1436 = vand.u32 %v1435, 8388607
      %v1437 = vor.u32 %v1436, 8388608
      %v1438 = vsub.s32 0, %v1437
      %v1439 = vadd.s32 %v1434, 1
      %vm1440 = vcmp.gt.s32.totalorder %v1439, 0
      %v1441 = vsel %vm1440, %v1439, 0
      %v1442 = vshrl.u32 %v1441, 5
      %v1443 = vand.u32 %v1441, 31
      %v1444 = vsub.s32 32, %v1443
      %v1445 = vshrl.u32 683565275, %v1444
      %v1446 = vshll.u32 683565275, %v1443
      %v1447 = vshrl.u32 2475754826, %v1444
      %v1448 = vor.u32 %v1446, %v1447
      %v1449 = vshll.u32 2475754826, %v1443
      %v1450 = vshrl.u32 2131351028, %v1444
      %v1451 = vor.u32 %v1449, %v1450
      %v1452 = vshll.u32 2131351028, %v1443
      %v1453 = vshrl.u32 2102212464, %v1444
      %v1454 = vor.u32 %v1452, %v1453
      %v1455 = vshll.u32 2102212464, %v1443
      %v1456 = vshrl.u32 920167782, %v1444
      %v1457 = vor.u32 %v1455, %v1456
      %v1458 = vshll.u32 920167782, %v1443
      %v1459 = vshrl.u32 1326507024, %v1444
      %v1460 = vor.u32 %v1458, %v1459
      %vm1461 = vcmp.lt.s32.totalorder %v1442, 1
      %vm1462 = vcmp.lt.s32.totalorder %v1442, 2
      %vm1463 = vcmp.lt.s32.totalorder %v1442, 3
      %vm1464 = vcmp.lt.s32.totalorder %v1442, 4
      %v1465 = vsel %vm1461, %v1445, %v1448
      %v1466 = vsel %vm1464, %v1454, 2102212464
      %v1467 = vsel %vm1463, %v1451, %v1466
      %v1468 = vsel %vm1462, %v1465, %v1467
      %v1469 = vsel %vm1461, %v1448, %v1451
      %v1470 = vsel %vm1464, %v1457, 920167782
      %v1471 = vsel %vm1463, %v1454, %v1470
      %v1472 = vsel %vm1462, %v1469, %v1471
      %v1473 = vsel %vm1461, %v1451, %v1454
      %v1474 = vsel %vm1464, %v1460, 1326507024
      %v1475 = vsel %vm1463, %v1457, %v1474
      %v1476 = vsel %vm1462, %v1473, %v1475
      %v1477 = vshll.u32 %v1437, 8
      %v1478 = vmul.u32.u64.compose %v1477, %v1476
      %v1479 = vextract.low.u32 %v1478
      %v1480 = vextract.high.u32 %v1478
      %v1481 = vmul.u32.u64.compose %v1477, %v1472
      %v1482 = vextract.low.u32 %v1481
      %v1483 = vextract.high.u32 %v1481
      %v1484 = vmul.u32 %v1477, %v1468
      %v1485 = vadd.s32 %v1480, %v1482
      %vm1486 = vc.u32 %v1480, %v1482
      %v1487 = vadd.s32 %v1483, 1
      %v1488 = vsel %vm1486, %v1487, %v1483
      %v1489 = vadd.s32 %v1484, %v1488
      %v1490 = vadd.s32 %v1489, 536870912
      %v1491 = vshrl.u32 %v1490, 30
      %v1492 = vshll.u32 %v1491, 30
      %v1493 = vsub.s32 %v1489, %v1492
      %vm1494 = vcmp.lt.s32.totalorder %v1493, 0
      %v1495 = vsub.s32 0, %v1493
      %v1496 = vsel %vm1494, %v1495, %v1493
      %v1497 = vclz %v1496
      %v1498 = vsub.s32 %v1497, 2
      %vm1499 = vcmp.gt.s32.totalorder 0, %v1498
      %v1500 = vsel %vm1499, 0, %v1498
      %v1501 = vsub.s32 32, %v1500
      %v1502 = vshll.u32 %v1493, %v1500
      %v1503 = vshrl.u32 %v1485, %v1501
      %v1504 = vor.u32 %v1502, %v1503
      %v1505 = vsub.s32 4294967266, %v1500
      %v1506 = vadd.s32 %v1505, 127
      %v1507 = vshll.u32 %v1506, 23
      %v1508 = vor.u32 4788187, %v1507
      %v1509 = vand.u32 2147483647, %v1508
      %v1511 = vcvt.s32.f32 %v1504
      %v1512 = vmul.f32 %v1511, %v1509
      %v1513 = vxor.u32 %v1512, 2147483648
      %v1514 = vsel %vm1431, %v1513, %v1512
      %v1515 = vsub.s32 4, %v1491
      %v1516 = vsel %vm1431, %v1515, %v1491
      %v1517 = vsel %vm1430, %v383, %v1514
      %v1518 = vsel %vm1430, 0, %v1516
      %v1519 = vcosq.f32.pop %v1517
      %v1520 = vsinq.f32.pop %v1517
      %vm1521 = vweird.f32 %v383
      %v1522 = vadd.s32 %v1518, 3
      %v1523 = vand.u32 %v1522, 3
      %vm1524 = vcmp.lt.s32.totalorder %v1523, 2
      %vm1525 = vcmp.eq.s32.totalorder %v1523, 0
      %v1526 = vxor.u32 %v1520, 2147483648
      %v1527 = vsel %vm1525, %v1519, %v1526
      %vm1528 = vcmp.eq.s32.totalorder %v1523, 2
      %v1529 = vxor.u32 %v1519, 2147483648
      %v1530 = vsel %vm1528, %v1529, %v1520
      %v1531 = vsel %vm1524, %v1527, %v1530
      %v1532 = vsel %vm1521, nan, %v1531
      %v1533 = vand.u32 2147483647, %v384
      %vm1534 = vcmp.le.f32.partialorder %v1533, 0.7853982
      %vm1535 = vcmp.lt.s32.totalorder %v384, 0
      %v1536 = vand.u32 %v384, 2139095040
      %v1537 = vshrl.u32 %v1536, 23
      %v1538 = vsub.s32 %v1537, 127
      %v1539 = vand.u32 2147483647, %v384
      %v1540 = vand.u32 %v1539, 8388607
      %v1541 = vor.u32 %v1540, 8388608
      %v1542 = vsub.s32 0, %v1541
      %v1543 = vadd.s32 %v1538, 1
      %vm1544 = vcmp.gt.s32.totalorder %v1543, 0
      %v1545 = vsel %vm1544, %v1543, 0
      %v1546 = vshrl.u32 %v1545, 5
      %v1547 = vand.u32 %v1545, 31
      %v1548 = vsub.s32 32, %v1547
      %v1549 = vshrl.u32 683565275, %v1548
      %v1550 = vshll.u32 683565275, %v1547
      %v1551 = vshrl.u32 2475754826, %v1548
      %v1552 = vor.u32 %v1550, %v1551
      %v1553 = vshll.u32 2475754826, %v1547
      %v1554 = vshrl.u32 2131351028, %v1548
      %v1555 = vor.u32 %v1553, %v1554
      %v1556 = vshll.u32 2131351028, %v1547
      %v1557 = vshrl.u32 2102212464, %v1548
      %v1558 = vor.u32 %v1556, %v1557
      %v1559 = vshll.u32 2102212464, %v1547
      %v1560 = vshrl.u32 920167782, %v1548
      %v1561 = vor.u32 %v1559, %v1560
      %v1562 = vshll.u32 920167782, %v1547
      %v1563 = vshrl.u32 1326507024, %v1548
      %v1564 = vor.u32 %v1562, %v1563
      %vm1565 = vcmp.lt.s32.totalorder %v1546, 1
      %vm1566 = vcmp.lt.s32.totalorder %v1546, 2
      %vm1567 = vcmp.lt.s32.totalorder %v1546, 3
      %vm1568 = vcmp.lt.s32.totalorder %v1546, 4
      %v1569 = vsel %vm1565, %v1549, %v1552
      %v1570 = vsel %vm1568, %v1558, 2102212464
      %v1571 = vsel %vm1567, %v1555, %v1570
      %v1572 = vsel %vm1566, %v1569, %v1571
      %v1573 = vsel %vm1565, %v1552, %v1555
      %v1574 = vsel %vm1568, %v1561, 920167782
      %v1575 = vsel %vm1567, %v1558, %v1574
      %v1576 = vsel %vm1566, %v1573, %v1575
      %v1577 = vsel %vm1565, %v1555, %v1558
      %v1578 = vsel %vm1568, %v1564, 1326507024
      %v1579 = vsel %vm1567, %v1561, %v1578
      %v1580 = vsel %vm1566, %v1577, %v1579
      %v1581 = vshll.u32 %v1541, 8
      %v1582 = vmul.u32.u64.compose %v1581, %v1580
      %v1583 = vextract.low.u32 %v1582
      %v1584 = vextract.high.u32 %v1582
      %v1585 = vmul.u32.u64.compose %v1581, %v1576
      %v1586 = vextract.low.u32 %v1585
      %v1587 = vextract.high.u32 %v1585
      %v1588 = vmul.u32 %v1581, %v1572
      %v1589 = vadd.s32 %v1584, %v1586
      %vm1590 = vc.u32 %v1584, %v1586
      %v1591 = vadd.s32 %v1587, 1
      %v1592 = vsel %vm1590, %v1591, %v1587
      %v1593 = vadd.s32 %v1588, %v1592
      %v1594 = vadd.s32 %v1593, 536870912
      %v1595 = vshrl.u32 %v1594, 30
      %v1596 = vshll.u32 %v1595, 30
      %v1597 = vsub.s32 %v1593, %v1596
      %vm1598 = vcmp.lt.s32.totalorder %v1597, 0
      %v1599 = vsub.s32 0, %v1597
      %v1600 = vsel %vm1598, %v1599, %v1597
      %v1601 = vclz %v1600
      %v1602 = vsub.s32 %v1601, 2
      %vm1603 = vcmp.gt.s32.totalorder 0, %v1602
      %v1604 = vsel %vm1603, 0, %v1602
      %v1605 = vsub.s32 32, %v1604
      %v1606 = vshll.u32 %v1597, %v1604
      %v1607 = vshrl.u32 %v1589, %v1605
      %v1608 = vor.u32 %v1606, %v1607
      %v1609 = vsub.s32 4294967266, %v1604
      %v1610 = vadd.s32 %v1609, 127
      %v1611 = vshll.u32 %v1610, 23
      %v1612 = vor.u32 4788187, %v1611
      %v1613 = vand.u32 2147483647, %v1612
      %v1615 = vcvt.s32.f32 %v1608
      %v1616 = vmul.f32 %v1615, %v1613
      %v1617 = vxor.u32 %v1616, 2147483648
      %v1618 = vsel %vm1535, %v1617, %v1616
      %v1619 = vsub.s32 4, %v1595
      %v1620 = vsel %vm1535, %v1619, %v1595
      %v1621 = vsel %vm1534, %v384, %v1618
      %v1622 = vsel %vm1534, 0, %v1620
      %v1623 = vcosq.f32.pop %v1621
      %v1624 = vsinq.f32.pop %v1621
      %vm1625 = vweird.f32 %v384
      %v1626 = vadd.s32 %v1622, 3
      %v1627 = vand.u32 %v1626, 3
      %vm1628 = vcmp.lt.s32.totalorder %v1627, 2
      %vm1629 = vcmp.eq.s32.totalorder %v1627, 0
      %v1630 = vxor.u32 %v1624, 2147483648
      %v1631 = vsel %vm1629, %v1623, %v1630
      %vm1632 = vcmp.eq.s32.totalorder %v1627, 2
      %v1633 = vxor.u32 %v1623, 2147483648
      %v1634 = vsel %vm1632, %v1633, %v1624
      %v1635 = vsel %vm1628, %v1631, %v1634
      %v1636 = vsel %vm1625, nan, %v1635
      %v1637 = vand.u32 2147483647, %v385
      %vm1638 = vcmp.le.f32.partialorder %v1637, 0.7853982
      %vm1639 = vcmp.lt.s32.totalorder %v385, 0
      %v1640 = vand.u32 %v385, 2139095040
      %v1641 = vshrl.u32 %v1640, 23
      %v1642 = vsub.s32 %v1641, 127
      %v1643 = vand.u32 2147483647, %v385
      %v1644 = vand.u32 %v1643, 8388607
      %v1645 = vor.u32 %v1644, 8388608
      %v1646 = vsub.s32 0, %v1645
      %v1647 = vadd.s32 %v1642, 1
      %vm1648 = vcmp.gt.s32.totalorder %v1647, 0
      %v1649 = vsel %vm1648, %v1647, 0
      %v1650 = vshrl.u32 %v1649, 5
      %v1651 = vand.u32 %v1649, 31
      %v1652 = vsub.s32 32, %v1651
      %v1653 = vshrl.u32 683565275, %v1652
      %v1654 = vshll.u32 683565275, %v1651
      %v1655 = vshrl.u32 2475754826, %v1652
      %v1656 = vor.u32 %v1654, %v1655
      %v1657 = vshll.u32 2475754826, %v1651
      %v1658 = vshrl.u32 2131351028, %v1652
      %v1659 = vor.u32 %v1657, %v1658
      %v1660 = vshll.u32 2131351028, %v1651
      %v1661 = vshrl.u32 2102212464, %v1652
      %v1662 = vor.u32 %v1660, %v1661
      %v1663 = vshll.u32 2102212464, %v1651
      %v1664 = vshrl.u32 920167782, %v1652
      %v1665 = vor.u32 %v1663, %v1664
      %v1666 = vshll.u32 920167782, %v1651
      %v1667 = vshrl.u32 1326507024, %v1652
      %v1668 = vor.u32 %v1666, %v1667
      %vm1669 = vcmp.lt.s32.totalorder %v1650, 1
      %vm1670 = vcmp.lt.s32.totalorder %v1650, 2
      %vm1671 = vcmp.lt.s32.totalorder %v1650, 3
      %vm1672 = vcmp.lt.s32.totalorder %v1650, 4
      %v1673 = vsel %vm1669, %v1653, %v1656
      %v1674 = vsel %vm1672, %v1662, 2102212464
      %v1675 = vsel %vm1671, %v1659, %v1674
      %v1676 = vsel %vm1670, %v1673, %v1675
      %v1677 = vsel %vm1669, %v1656, %v1659
      %v1678 = vsel %vm1672, %v1665, 920167782
      %v1679 = vsel %vm1671, %v1662, %v1678
      %v1680 = vsel %vm1670, %v1677, %v1679
      %v1681 = vsel %vm1669, %v1659, %v1662
      %v1682 = vsel %vm1672, %v1668, 1326507024
      %v1683 = vsel %vm1671, %v1665, %v1682
      %v1684 = vsel %vm1670, %v1681, %v1683
      %v1685 = vshll.u32 %v1645, 8
      %v1686 = vmul.u32.u64.compose %v1685, %v1684
      %v1687 = vextract.low.u32 %v1686
      %v1688 = vextract.high.u32 %v1686
      %v1689 = vmul.u32.u64.compose %v1685, %v1680
      %v1690 = vextract.low.u32 %v1689
      %v1691 = vextract.high.u32 %v1689
      %v1692 = vmul.u32 %v1685, %v1676
      %v1693 = vadd.s32 %v1688, %v1690
      %vm1694 = vc.u32 %v1688, %v1690
      %v1695 = vadd.s32 %v1691, 1
      %v1696 = vsel %vm1694, %v1695, %v1691
      %v1697 = vadd.s32 %v1692, %v1696
      %v1698 = vadd.s32 %v1697, 536870912
      %v1699 = vshrl.u32 %v1698, 30
      %v1700 = vshll.u32 %v1699, 30
      %v1701 = vsub.s32 %v1697, %v1700
      %vm1702 = vcmp.lt.s32.totalorder %v1701, 0
      %v1703 = vsub.s32 0, %v1701
      %v1704 = vsel %vm1702, %v1703, %v1701
      %v1705 = vclz %v1704
      %v1706 = vsub.s32 %v1705, 2
      %vm1707 = vcmp.gt.s32.totalorder 0, %v1706
      %v1708 = vsel %vm1707, 0, %v1706
      %v1709 = vsub.s32 32, %v1708
      %v1710 = vshll.u32 %v1701, %v1708
      %v1711 = vshrl.u32 %v1693, %v1709
      %v1712 = vor.u32 %v1710, %v1711
      %v1713 = vsub.s32 4294967266, %v1708
      %v1714 = vadd.s32 %v1713, 127
      %v1715 = vshll.u32 %v1714, 23
      %v1716 = vor.u32 4788187, %v1715
      %v1717 = vand.u32 2147483647, %v1716
      %v1719 = vcvt.s32.f32 %v1712
      %v1720 = vmul.f32 %v1719, %v1717
      %v1721 = vxor.u32 %v1720, 2147483648
      %v1722 = vsel %vm1639, %v1721, %v1720
      %v1723 = vsub.s32 4, %v1699
      %v1724 = vsel %vm1639, %v1723, %v1699
      %v1725 = vsel %vm1638, %v385, %v1722
      %v1726 = vsel %vm1638, 0, %v1724
      %v1727 = vcosq.f32.pop %v1725
      %v1728 = vsinq.f32.pop %v1725
      %vm1729 = vweird.f32 %v385
      %v1730 = vadd.s32 %v1726, 3
      %v1731 = vand.u32 %v1730, 3
      %vm1732 = vcmp.lt.s32.totalorder %v1731, 2
      %vm1733 = vcmp.eq.s32.totalorder %v1731, 0
      %v1734 = vxor.u32 %v1728, 2147483648
      %v1735 = vsel %vm1733, %v1727, %v1734
      %vm1736 = vcmp.eq.s32.totalorder %v1731, 2
      %v1737 = vxor.u32 %v1727, 2147483648
      %v1738 = vsel %vm1736, %v1737, %v1728
      %v1739 = vsel %vm1732, %v1735, %v1738
      %v1740 = vsel %vm1729, nan, %v1739
      %v1741 = vand.u32 2147483647, %v386
      %vm1742 = vcmp.le.f32.partialorder %v1741, 0.7853982
      %vm1743 = vcmp.lt.s32.totalorder %v386, 0
      %v1744 = vand.u32 %v386, 2139095040
      %v1745 = vshrl.u32 %v1744, 23
      %v1746 = vsub.s32 %v1745, 127
      %v1747 = vand.u32 2147483647, %v386
      %v1748 = vand.u32 %v1747, 8388607
      %v1749 = vor.u32 %v1748, 8388608
      %v1750 = vsub.s32 0, %v1749
      %v1751 = vadd.s32 %v1746, 1
      %vm1752 = vcmp.gt.s32.totalorder %v1751, 0
      %v1753 = vsel %vm1752, %v1751, 0
      %v1754 = vshrl.u32 %v1753, 5
      %v1755 = vand.u32 %v1753, 31
      %v1756 = vsub.s32 32, %v1755
      %v1757 = vshrl.u32 683565275, %v1756
      %v1758 = vshll.u32 683565275, %v1755
      %v1759 = vshrl.u32 2475754826, %v1756
      %v1760 = vor.u32 %v1758, %v1759
      %v1761 = vshll.u32 2475754826, %v1755
      %v1762 = vshrl.u32 2131351028, %v1756
      %v1763 = vor.u32 %v1761, %v1762
      %v1764 = vshll.u32 2131351028, %v1755
      %v1765 = vshrl.u32 2102212464, %v1756
      %v1766 = vor.u32 %v1764, %v1765
      %v1767 = vshll.u32 2102212464, %v1755
      %v1768 = vshrl.u32 920167782, %v1756
      %v1769 = vor.u32 %v1767, %v1768
      %v1770 = vshll.u32 920167782, %v1755
      %v1771 = vshrl.u32 1326507024, %v1756
      %v1772 = vor.u32 %v1770, %v1771
      %vm1773 = vcmp.lt.s32.totalorder %v1754, 1
      %vm1774 = vcmp.lt.s32.totalorder %v1754, 2
      %vm1775 = vcmp.lt.s32.totalorder %v1754, 3
      %vm1776 = vcmp.lt.s32.totalorder %v1754, 4
      %v1777 = vsel %vm1773, %v1757, %v1760
      %v1778 = vsel %vm1776, %v1766, 2102212464
      %v1779 = vsel %vm1775, %v1763, %v1778
      %v1780 = vsel %vm1774, %v1777, %v1779
      %v1781 = vsel %vm1773, %v1760, %v1763
      %v1782 = vsel %vm1776, %v1769, 920167782
      %v1783 = vsel %vm1775, %v1766, %v1782
      %v1784 = vsel %vm1774, %v1781, %v1783
      %v1785 = vsel %vm1773, %v1763, %v1766
      %v1786 = vsel %vm1776, %v1772, 1326507024
      %v1787 = vsel %vm1775, %v1769, %v1786
      %v1788 = vsel %vm1774, %v1785, %v1787
      %v1789 = vshll.u32 %v1749, 8
      %v1790 = vmul.u32.u64.compose %v1789, %v1788
      %v1791 = vextract.low.u32 %v1790
      %v1792 = vextract.high.u32 %v1790
      %v1793 = vmul.u32.u64.compose %v1789, %v1784
      %v1794 = vextract.low.u32 %v1793
      %v1795 = vextract.high.u32 %v1793
      %v1796 = vmul.u32 %v1789, %v1780
      %v1797 = vadd.s32 %v1792, %v1794
      %vm1798 = vc.u32 %v1792, %v1794
      %v1799 = vadd.s32 %v1795, 1
      %v1800 = vsel %vm1798, %v1799, %v1795
      %v1801 = vadd.s32 %v1796, %v1800
      %v1802 = vadd.s32 %v1801, 536870912
      %v1803 = vshrl.u32 %v1802, 30
      %v1804 = vshll.u32 %v1803, 30
      %v1805 = vsub.s32 %v1801, %v1804
      %vm1806 = vcmp.lt.s32.totalorder %v1805, 0
      %v1807 = vsub.s32 0, %v1805
      %v1808 = vsel %vm1806, %v1807, %v1805
      %v1809 = vclz %v1808
      %v1810 = vsub.s32 %v1809, 2
      %vm1811 = vcmp.gt.s32.totalorder 0, %v1810
      %v1812 = vsel %vm1811, 0, %v1810
      %v1813 = vsub.s32 32, %v1812
      %v1814 = vshll.u32 %v1805, %v1812
      %v1815 = vshrl.u32 %v1797, %v1813
      %v1816 = vor.u32 %v1814, %v1815
      %v1817 = vsub.s32 4294967266, %v1812
      %v1818 = vadd.s32 %v1817, 127
      %v1819 = vshll.u32 %v1818, 23
      %v1820 = vor.u32 4788187, %v1819
      %v1821 = vand.u32 2147483647, %v1820
      %v1823 = vcvt.s32.f32 %v1816
      %v1824 = vmul.f32 %v1823, %v1821
      %v1825 = vxor.u32 %v1824, 2147483648
      %v1826 = vsel %vm1743, %v1825, %v1824
      %v1827 = vsub.s32 4, %v1803
      %v1828 = vsel %vm1743, %v1827, %v1803
      %v1829 = vsel %vm1742, %v386, %v1826
      %v1830 = vsel %vm1742, 0, %v1828
      %v1831 = vcosq.f32.pop %v1829
      %v1832 = vsinq.f32.pop %v1829
      %vm1833 = vweird.f32 %v386
      %v1834 = vadd.s32 %v1830, 3
      %v1835 = vand.u32 %v1834, 3
      %vm1836 = vcmp.lt.s32.totalorder %v1835, 2
      %vm1837 = vcmp.eq.s32.totalorder %v1835, 0
      %v1838 = vxor.u32 %v1832, 2147483648
      %v1839 = vsel %vm1837, %v1831, %v1838
      %vm1840 = vcmp.eq.s32.totalorder %v1835, 2
      %v1841 = vxor.u32 %v1831, 2147483648
      %v1842 = vsel %vm1840, %v1841, %v1832
      %v1843 = vsel %vm1836, %v1839, %v1842
      %v1844 = vsel %vm1833, nan, %v1843
      %v1845 = vand.u32 2147483647, %v387
      %vm1846 = vcmp.le.f32.partialorder %v1845, 0.7853982
      %vm1847 = vcmp.lt.s32.totalorder %v387, 0
      %v1848 = vand.u32 %v387, 2139095040
      %v1849 = vshrl.u32 %v1848, 23
      %v1850 = vsub.s32 %v1849, 127
      %v1851 = vand.u32 2147483647, %v387
      %v1852 = vand.u32 %v1851, 8388607
      %v1853 = vor.u32 %v1852, 8388608
      %v1854 = vsub.s32 0, %v1853
      %v1855 = vadd.s32 %v1850, 1
      %vm1856 = vcmp.gt.s32.totalorder %v1855, 0
      %v1857 = vsel %vm1856, %v1855, 0
      %v1858 = vshrl.u32 %v1857, 5
      %v1859 = vand.u32 %v1857, 31
      %v1860 = vsub.s32 32, %v1859
      %v1861 = vshrl.u32 683565275, %v1860
      %v1862 = vshll.u32 683565275, %v1859
      %v1863 = vshrl.u32 2475754826, %v1860
      %v1864 = vor.u32 %v1862, %v1863
      %v1865 = vshll.u32 2475754826, %v1859
      %v1866 = vshrl.u32 2131351028, %v1860
      %v1867 = vor.u32 %v1865, %v1866
      %v1868 = vshll.u32 2131351028, %v1859
      %v1869 = vshrl.u32 2102212464, %v1860
      %v1870 = vor.u32 %v1868, %v1869
      %v1871 = vshll.u32 2102212464, %v1859
      %v1872 = vshrl.u32 920167782, %v1860
      %v1873 = vor.u32 %v1871, %v1872
      %v1874 = vshll.u32 920167782, %v1859
      %v1875 = vshrl.u32 1326507024, %v1860
      %v1876 = vor.u32 %v1874, %v1875
      %vm1877 = vcmp.lt.s32.totalorder %v1858, 1
      %vm1878 = vcmp.lt.s32.totalorder %v1858, 2
      %vm1879 = vcmp.lt.s32.totalorder %v1858, 3
      %vm1880 = vcmp.lt.s32.totalorder %v1858, 4
      %v1881 = vsel %vm1877, %v1861, %v1864
      %v1882 = vsel %vm1880, %v1870, 2102212464
      %v1883 = vsel %vm1879, %v1867, %v1882
      %v1884 = vsel %vm1878, %v1881, %v1883
      %v1885 = vsel %vm1877, %v1864, %v1867
      %v1886 = vsel %vm1880, %v1873, 920167782
      %v1887 = vsel %vm1879, %v1870, %v1886
      %v1888 = vsel %vm1878, %v1885, %v1887
      %v1889 = vsel %vm1877, %v1867, %v1870
      %v1890 = vsel %vm1880, %v1876, 1326507024
      %v1891 = vsel %vm1879, %v1873, %v1890
      %v1892 = vsel %vm1878, %v1889, %v1891
      %v1893 = vshll.u32 %v1853, 8
      %v1894 = vmul.u32.u64.compose %v1893, %v1892
      %v1895 = vextract.low.u32 %v1894
      %v1896 = vextract.high.u32 %v1894
      %v1897 = vmul.u32.u64.compose %v1893, %v1888
      %v1898 = vextract.low.u32 %v1897
      %v1899 = vextract.high.u32 %v1897
      %v1900 = vmul.u32 %v1893, %v1884
      %v1901 = vadd.s32 %v1896, %v1898
      %vm1902 = vc.u32 %v1896, %v1898
      %v1903 = vadd.s32 %v1899, 1
      %v1904 = vsel %vm1902, %v1903, %v1899
      %v1905 = vadd.s32 %v1900, %v1904
      %v1906 = vadd.s32 %v1905, 536870912
      %v1907 = vshrl.u32 %v1906, 30
      %v1908 = vshll.u32 %v1907, 30
      %v1909 = vsub.s32 %v1905, %v1908
      %vm1910 = vcmp.lt.s32.totalorder %v1909, 0
      %v1911 = vsub.s32 0, %v1909
      %v1912 = vsel %vm1910, %v1911, %v1909
      %v1913 = vclz %v1912
      %v1914 = vsub.s32 %v1913, 2
      %vm1915 = vcmp.gt.s32.totalorder 0, %v1914
      %v1916 = vsel %vm1915, 0, %v1914
      %v1917 = vsub.s32 32, %v1916
      %v1918 = vshll.u32 %v1909, %v1916
      %v1919 = vshrl.u32 %v1901, %v1917
      %v1920 = vor.u32 %v1918, %v1919
      %v1921 = vsub.s32 4294967266, %v1916
      %v1922 = vadd.s32 %v1921, 127
      %v1923 = vshll.u32 %v1922, 23
      %v1924 = vor.u32 4788187, %v1923
      %v1925 = vand.u32 2147483647, %v1924
      %v1927 = vcvt.s32.f32 %v1920
      %v1928 = vmul.f32 %v1927, %v1925
      %v1929 = vxor.u32 %v1928, 2147483648
      %v1930 = vsel %vm1847, %v1929, %v1928
      %v1931 = vsub.s32 4, %v1907
      %v1932 = vsel %vm1847, %v1931, %v1907
      %v1933 = vsel %vm1846, %v387, %v1930
      %v1934 = vsel %vm1846, 0, %v1932
      %v1935 = vcosq.f32.pop %v1933
      %v1936 = vsinq.f32.pop %v1933
      %vm1937 = vweird.f32 %v387
      %v1938 = vadd.s32 %v1934, 3
      %v1939 = vand.u32 %v1938, 3
      %vm1940 = vcmp.lt.s32.totalorder %v1939, 2
      %vm1941 = vcmp.eq.s32.totalorder %v1939, 0
      %v1942 = vxor.u32 %v1936, 2147483648
      %v1943 = vsel %vm1941, %v1935, %v1942
      %vm1944 = vcmp.eq.s32.totalorder %v1939, 2
      %v1945 = vxor.u32 %v1935, 2147483648
      %v1946 = vsel %vm1944, %v1945, %v1936
      %v1947 = vsel %vm1940, %v1943, %v1946
      %v1948 = vsel %vm1937, nan, %v1947
      %v1949 = vand.u32 2147483647, %v388
      %vm1950 = vcmp.le.f32.partialorder %v1949, 0.7853982
      %vm1951 = vcmp.lt.s32.totalorder %v388, 0
      %v1952 = vand.u32 %v388, 2139095040
      %v1953 = vshrl.u32 %v1952, 23
      %v1954 = vsub.s32 %v1953, 127
      %v1955 = vand.u32 2147483647, %v388
      %v1956 = vand.u32 %v1955, 8388607
      %v1957 = vor.u32 %v1956, 8388608
      %v1958 = vsub.s32 0, %v1957
      %v1959 = vadd.s32 %v1954, 1
      %vm1960 = vcmp.gt.s32.totalorder %v1959, 0
      %v1961 = vsel %vm1960, %v1959, 0
      %v1962 = vshrl.u32 %v1961, 5
      %v1963 = vand.u32 %v1961, 31
      %v1964 = vsub.s32 32, %v1963
      %v1965 = vshrl.u32 683565275, %v1964
      %v1966 = vshll.u32 683565275, %v1963
      %v1967 = vshrl.u32 2475754826, %v1964
      %v1968 = vor.u32 %v1966, %v1967
      %v1969 = vshll.u32 2475754826, %v1963
      %v1970 = vshrl.u32 2131351028, %v1964
      %v1971 = vor.u32 %v1969, %v1970
      %v1972 = vshll.u32 2131351028, %v1963
      %v1973 = vshrl.u32 2102212464, %v1964
      %v1974 = vor.u32 %v1972, %v1973
      %v1975 = vshll.u32 2102212464, %v1963
      %v1976 = vshrl.u32 920167782, %v1964
      %v1977 = vor.u32 %v1975, %v1976
      %v1978 = vshll.u32 920167782, %v1963
      %v1979 = vshrl.u32 1326507024, %v1964
      %v1980 = vor.u32 %v1978, %v1979
      %vm1981 = vcmp.lt.s32.totalorder %v1962, 1
      %vm1982 = vcmp.lt.s32.totalorder %v1962, 2
      %vm1983 = vcmp.lt.s32.totalorder %v1962, 3
      %vm1984 = vcmp.lt.s32.totalorder %v1962, 4
      %v1985 = vsel %vm1981, %v1965, %v1968
      %v1986 = vsel %vm1984, %v1974, 2102212464
      %v1987 = vsel %vm1983, %v1971, %v1986
      %v1988 = vsel %vm1982, %v1985, %v1987
      %v1989 = vsel %vm1981, %v1968, %v1971
      %v1990 = vsel %vm1984, %v1977, 920167782
      %v1991 = vsel %vm1983, %v1974, %v1990
      %v1992 = vsel %vm1982, %v1989, %v1991
      %v1993 = vsel %vm1981, %v1971, %v1974
      %v1994 = vsel %vm1984, %v1980, 1326507024
      %v1995 = vsel %vm1983, %v1977, %v1994
      %v1996 = vsel %vm1982, %v1993, %v1995
      %v1997 = vshll.u32 %v1957, 8
      %v1998 = vmul.u32.u64.compose %v1997, %v1996
      %v1999 = vextract.low.u32 %v1998
      %v2000 = vextract.high.u32 %v1998
      %v2001 = vmul.u32.u64.compose %v1997, %v1992
      %v2002 = vextract.low.u32 %v2001
      %v2003 = vextract.high.u32 %v2001
      %v2004 = vmul.u32 %v1997, %v1988
      %v2005 = vadd.s32 %v2000, %v2002
      %vm2006 = vc.u32 %v2000, %v2002
      %v2007 = vadd.s32 %v2003, 1
      %v2008 = vsel %vm2006, %v2007, %v2003
      %v2009 = vadd.s32 %v2004, %v2008
      %v2010 = vadd.s32 %v2009, 536870912
      %v2011 = vshrl.u32 %v2010, 30
      %v2012 = vshll.u32 %v2011, 30
      %v2013 = vsub.s32 %v2009, %v2012
      %vm2014 = vcmp.lt.s32.totalorder %v2013, 0
      %v2015 = vsub.s32 0, %v2013
      %v2016 = vsel %vm2014, %v2015, %v2013
      %v2017 = vclz %v2016
      %v2018 = vsub.s32 %v2017, 2
      %vm2019 = vcmp.gt.s32.totalorder 0, %v2018
      %v2020 = vsel %vm2019, 0, %v2018
      %v2021 = vsub.s32 32, %v2020
      %v2022 = vshll.u32 %v2013, %v2020
      %v2023 = vshrl.u32 %v2005, %v2021
      %v2024 = vor.u32 %v2022, %v2023
      %v2025 = vsub.s32 4294967266, %v2020
      %v2026 = vadd.s32 %v2025, 127
      %v2027 = vshll.u32 %v2026, 23
      %v2028 = vor.u32 4788187, %v2027
      %v2029 = vand.u32 2147483647, %v2028
      %v2031 = vcvt.s32.f32 %v2024
      %v2032 = vmul.f32 %v2031, %v2029
      %v2033 = vxor.u32 %v2032, 2147483648
      %v2034 = vsel %vm1951, %v2033, %v2032
      %v2035 = vsub.s32 4, %v2011
      %v2036 = vsel %vm1951, %v2035, %v2011
      %v2037 = vsel %vm1950, %v388, %v2034
      %v2038 = vsel %vm1950, 0, %v2036
      %v2039 = vcosq.f32.pop %v2037
      %v2040 = vsinq.f32.pop %v2037
      %vm2041 = vweird.f32 %v388
      %v2042 = vadd.s32 %v2038, 3
      %v2043 = vand.u32 %v2042, 3
      %vm2044 = vcmp.lt.s32.totalorder %v2043, 2
      %vm2045 = vcmp.eq.s32.totalorder %v2043, 0
      %v2046 = vxor.u32 %v2040, 2147483648
      %v2047 = vsel %vm2045, %v2039, %v2046
      %vm2048 = vcmp.eq.s32.totalorder %v2043, 2
      %v2049 = vxor.u32 %v2039, 2147483648
      %v2050 = vsel %vm2048, %v2049, %v2040
      %v2051 = vsel %vm2044, %v2047, %v2050
      %v2052 = vsel %vm2041, nan, %v2051
      %v2053 = vld [vmem:[%s2] sm:$0xff]
      %v2054 = vld [vmem:[%s2 + $0x8] sm:$0xff]
      %v2055 = vld [vmem:[%s2 + $0x10] sm:$0xff]
      %v2056 = vld [vmem:[%s2 + $0x18] sm:$0xff]
      %v2057 = vld [vmem:[%s2 + $0x20] sm:$0xff]
      %v2058 = vld [vmem:[%s2 + $0x28] sm:$0xff]
      %v2059 = vld [vmem:[%s2 + $0x30] sm:$0xff]
      %v2060 = vld [vmem:[%s2 + $0x38] sm:$0xff]
      %2061 = vrot.lane.b32.xlu0 %v352, 64
      %v2062 = vpop.permute.xlu0 %2061
      %vm2064 = vcmask 261120
      %v2066 = vsel %vm2064, %v492, 0
      %v2069 = vsel %vm2064, %v596, 0
      %v2072 = vsel %vm2064, %v700, 0
      %v2075 = vsel %vm2064, %v804, 0
      %v2078 = vsel %vm2064, %v908, 0
      %v2081 = vsel %vm2064, %v1012, 0
      %v2084 = vsel %vm2064, %v1116, 0
      %v2087 = vsel %vm2064, %v1220, 0
      %v2090 = vsel %vm2064, %v1324, 0
      %v2093 = vsel %vm2064, %v1428, 0
      %v2096 = vsel %vm2064, %v1532, 0
      %v2099 = vsel %vm2064, %v1636, 0
      %v2102 = vsel %vm2064, %v1740, 0
      %v2105 = vsel %vm2064, %v1844, 0
      %v2108 = vsel %vm2064, %v1948, 0
      %v2111 = vsel %vm2064, %v2052, 0
      %2113 = vmatprep.subr.mxu0 0.0
      %2114 = vmatpush1.msra.mxu0 %v2053
      %2115 = vmatprep.subr.mxu0 0.0
      %2116 = vmatpush1.msra.mxu0 %v2054
      %2117 = vmatprep.subr.mxu0 0.0
      %2118 = vmatpush1.msra.mxu0 %v2055
      %2119 = vmatprep.subr.mxu0 0.0
      %2120 = vmatpush1.msra.mxu0 %v2056
      %2121 = vmatprep.subr.mxu0 0.0
      %2122 = vmatpush1.msra.mxu0 0.0
      %2123 = vmatprep.subr.mxu0 0.0
      %2124 = vmatpush1.msra.mxu0 0.0
      %2125 = vmatprep.subr.mxu0 0.0
      %2126 = vmatpush1.msra.mxu0 0.0
      %2127 = vmatprep.subr.mxu0 0.0
      %2128 = vmatpush1.msra.mxu0 0.0
      %2129 = vmatprep.subr.mxu0 0.0
      %2130 = vmatpush1.msra.mxu0 0.0
      %2131 = vmatprep.subr.mxu0 0.0
      %2132 = vmatpush1.msra.mxu0 0.0
      %2133 = vmatprep.subr.mxu0 0.0
      %2134 = vmatpush1.msra.mxu0 0.0
      %2135 = vmatprep.subr.mxu0 0.0
      %2136 = vmatpush1.msra.mxu0 0.0
      %2137 = vmatprep.subr.mxu0 0.0
      %2138 = vmatpush1.msra.mxu0 0.0
      %2139 = vmatprep.subr.mxu0 0.0
      %2140 = vmatpush1.msra.mxu0 0.0
      %2141 = vmatprep.subr.mxu0 0.0
      %2142 = vmatpush1.msra.mxu0 0.0
      %2143 = vmatprep.subr.mxu0 0.0
      %2144 = vmatpush1.msra.mxu0 0.0
      %2145 = vmatprep.subr.mxu0 0.0
      %2146 = vmatpush1.msra.mxu0 0.0
      %2147 = vmatprep.subr.mxu0 0.0
      %2148 = vmatpush1.msra.mxu0 0.0
      %2149 = vmatprep.subr.mxu0 0.0
      %2150 = vmatpush1.msra.mxu0 0.0
      %2151 = vmatprep.subr.mxu0 0.0
      %2152 = vmatpush1.msra.mxu0 0.0
      %2153 = vmatprep.subr.mxu0 0.0
      %2154 = vmatpush1.msra.mxu0 0.0
      %2155 = vmatprep.subr.mxu0 0.0
      %2156 = vmatpush1.msra.mxu0 0.0
      %2157 = vmatprep.subr.mxu0 0.0
      %2158 = vmatpush1.msra.mxu0 0.0
      %2159 = vmatprep.subr.mxu0 0.0
      %2160 = vmatpush1.msra.mxu0 0.0
      %2161 = vmatprep.subr.mxu0 0.0
      %2162 = vmatpush1.msra.mxu0 0.0
      %2163 = vmatprep.subr.mxu0 0.0
      %2164 = vmatpush1.msra.mxu0 0.0
      %2165 = vmatprep.subr.mxu0 0.0
      %2166 = vmatpush1.msra.mxu0 0.0
      %2167 = vmatprep.subr.mxu0 0.0
      %2168 = vmatpush1.msra.mxu0 0.0
      %2169 = vmatprep.subr.mxu0 0.0
      %2170 = vmatpush1.msra.mxu0 0.0
      %2171 = vmatprep.subr.mxu0 0.0
      %2172 = vmatpush1.msra.mxu0 0.0
      %2173 = vmatprep.subr.mxu0 0.0
      %2174 = vmatpush1.msra.mxu0 0.0
      %2175 = vmatprep.subr.mxu0 0.0
      %2176 = vmatpush1.msra.mxu0 0.0
      %2177 = vmatprep.mubr.f32.mxu0 0.0
      %2178 = vmatmul.mubr.f32.gmra.mrb[0].mxu0 %v2066
      %v2179 = vpop.f32.mrb[0].mxu0
      %v2180 = vadd.f32 %v2062, %v2179
      %v2181 = vpop.f32.mrb[0].mxu0
      %2182 = vmatprep.mubr.f32.mxu0 0.0
      %2183 = vmatmul.mubr.f32.gmra.mrb[0].mxu0 %v2069
      %v2184 = vpop.f32.mrb[0].mxu0
      %v2185 = vadd.f32 %v2062, %v2184
      %v2186 = vpop.f32.mrb[0].mxu0
      %2187 = vmatprep.mubr.f32.mxu0 0.0
      %2188 = vmatmul.mubr.f32.gmra.mrb[0].mxu0 %v2072
      %v2189 = vpop.f32.mrb[0].mxu0
      %v2190 = vadd.f32 %v2062, %v2189
      %v2191 = vpop.f32.mrb[0].mxu0
      %2192 = vmatprep.mubr.f32.mxu0 0.0
      %2193 = vmatmul.mubr.f32.gmra.mrb[0].mxu0 %v2075
      %v2194 = vpop.f32.mrb[0].mxu0
      %v2195 = vadd.f32 %v2062, %v2194
      %v2196 = vpop.f32.mrb[0].mxu0
      %2197 = vmatprep.mubr.f32.mxu0 0.0
      %2198 = vmatmul.mubr.f32.gmra.mrb[0].mxu0 %v2078
      %v2199 = vpop.f32.mrb[0].mxu0
      %v2200 = vadd.f32 %v2062, %v2199
      %v2201 = vpop.f32.mrb[0].mxu0
      %2202 = vmatprep.mubr.f32.mxu0 0.0
      %2203 = vmatmul.mubr.f32.gmra.mrb[0].mxu0 %v2081
      %v2204 = vpop.f32.mrb[0].mxu0
      %v2205 = vadd.f32 %v2062, %v2204
      %v2206 = vpop.f32.mrb[0].mxu0
      %2207 = vmatprep.mubr.f32.mxu0 0.0
      %2208 = vmatmul.mubr.f32.gmra.mrb[0].mxu0 %v2084
      %v2209 = vpop.f32.mrb[0].mxu0
      %v2210 = vadd.f32 %v2062, %v2209
      %v2211 = vpop.f32.mrb[0].mxu0
      %2212 = vmatprep.mubr.f32.mxu0 0.0
      %2213 = vmatmul.mubr.f32.gmra.mrb[0].mxu0 %v2087
      %v2214 = vpop.f32.mrb[0].mxu0
      %v2215 = vadd.f32 %v2062, %v2214
      %v2216 = vpop.f32.mrb[0].mxu0
      %2217 = vmatprep.mubr.f32.mxu0 0.0
      %2218 = vmatmul.mubr.f32.gmra.mrb[0].mxu0 %v2090
      %v2219 = vpop.f32.mrb[0].mxu0
      %v2220 = vadd.f32 %v2062, %v2219
      %v2221 = vpop.f32.mrb[0].mxu0
      %2222 = vmatprep.mubr.f32.mxu0 0.0
      %2223 = vmatmul.mubr.f32.gmra.mrb[0].mxu0 %v2093
      %v2224 = vpop.f32.mrb[0].mxu0
      %v2225 = vadd.f32 %v2062, %v2224
      %v2226 = vpop.f32.mrb[0].mxu0
      %2227 = vmatprep.mubr.f32.mxu0 0.0
      %2228 = vmatmul.mubr.f32.gmra.mrb[0].mxu0 %v2096
      %v2229 = vpop.f32.mrb[0].mxu0
      %v2230 = vadd.f32 %v2062, %v2229
      %v2231 = vpop.f32.mrb[0].mxu0
      %2232 = vmatprep.mubr.f32.mxu0 0.0
      %2233 = vmatmul.mubr.f32.gmra.mrb[0].mxu0 %v2099
      %v2234 = vpop.f32.mrb[0].mxu0
      %v2235 = vadd.f32 %v2062, %v2234
      %v2236 = vpop.f32.mrb[0].mxu0
      %2237 = vmatprep.mubr.f32.mxu0 0.0
      %2238 = vmatmul.mubr.f32.gmra.mrb[0].mxu0 %v2102
      %v2239 = vpop.f32.mrb[0].mxu0
      %v2240 = vadd.f32 %v2062, %v2239
      %v2241 = vpop.f32.mrb[0].mxu0
      %2242 = vmatprep.mubr.f32.mxu0 0.0
      %2243 = vmatmul.mubr.f32.gmra.mrb[0].mxu0 %v2105
      %v2244 = vpop.f32.mrb[0].mxu0
      %v2245 = vadd.f32 %v2062, %v2244
      %v2246 = vpop.f32.mrb[0].mxu0
      %2247 = vmatprep.mubr.f32.mxu0 0.0
      %2248 = vmatmul.mubr.f32.gmra.mrb[0].mxu0 %v2108
      %v2249 = vpop.f32.mrb[0].mxu0
      %v2250 = vadd.f32 %v2062, %v2249
      %v2251 = vpop.f32.mrb[0].mxu0
      %2252 = vmatprep.mubr.f32.mxu0 0.0
      %2253 = vmatmul.mubr.f32.gmra.mrb[0].mxu0 %v2111
      %v2254 = vpop.f32.mrb[0].mxu0
      %v2255 = vadd.f32 %v2062, %v2254
      %v2256 = vpop.f32.mrb[0].mxu0
      %2257 = vdwg.mxu0
      %v2258 = vmul.f32 %v2180, 0.5
      %v2259 = vmul.f32 %v2185, 0.5
      %v2260 = vmul.f32 %v2190, 0.5
      %v2261 = vmul.f32 %v2195, 0.5
      %v2262 = vmul.f32 %v2200, 0.5
      %v2263 = vmul.f32 %v2205, 0.5
      %v2264 = vmul.f32 %v2210, 0.5
      %v2265 = vmul.f32 %v2215, 0.5
      %v2266 = vmul.f32 %v2220, 0.5
      %v2267 = vmul.f32 %v2225, 0.5
      %v2268 = vmul.f32 %v2230, 0.5
      %v2269 = vmul.f32 %v2235, 0.5
      %v2270 = vmul.f32 %v2240, 0.5
      %v2271 = vmul.f32 %v2245, 0.5
      %v2272 = vmul.f32 %v2250, 0.5
      %v2273 = vmul.f32 %v2255, 0.5
      %v2274 = vmul.f32 %v2180, 0.70710677
      %v2275 = vmul.f32 %v2185, 0.70710677
      %v2276 = vmul.f32 %v2190, 0.70710677
      %v2277 = vmul.f32 %v2195, 0.70710677
      %v2278 = vmul.f32 %v2200, 0.70710677
      %v2279 = vmul.f32 %v2205, 0.70710677
      %v2280 = vmul.f32 %v2210, 0.70710677
      %v2281 = vmul.f32 %v2215, 0.70710677
      %v2282 = vmul.f32 %v2220, 0.70710677
      %v2283 = vmul.f32 %v2225, 0.70710677
      %v2284 = vmul.f32 %v2230, 0.70710677
      %v2285 = vmul.f32 %v2235, 0.70710677
      %v2286 = vmul.f32 %v2240, 0.70710677
      %v2287 = vmul.f32 %v2245, 0.70710677
      %v2288 = vmul.f32 %v2250, 0.70710677
      %v2289 = vmul.f32 %v2255, 0.70710677
      %v2290 = verf.f32.pop %v2274
      %v2291 = verf.f32.pop %v2275
      %v2292 = verf.f32.pop %v2276
      %v2293 = verf.f32.pop %v2277
      %v2294 = verf.f32.pop %v2278
      %v2295 = verf.f32.pop %v2279
      %v2296 = verf.f32.pop %v2280
      %v2297 = verf.f32.pop %v2281
      %v2298 = verf.f32.pop %v2282
      %v2299 = verf.f32.pop %v2283
      %v2300 = verf.f32.pop %v2284
      %v2301 = verf.f32.pop %v2285
      %v2302 = verf.f32.pop %v2286
      %v2303 = verf.f32.pop %v2287
      %v2304 = verf.f32.pop %v2288
      %v2305 = verf.f32.pop %v2289
      %v2306 = vadd.f32 %v2290, 1.0
      %v2307 = vadd.f32 %v2291, 1.0
      %v2308 = vadd.f32 %v2292, 1.0
      %v2309 = vadd.f32 %v2293, 1.0
      %v2310 = vadd.f32 %v2294, 1.0
      %v2311 = vadd.f32 %v2295, 1.0
      %v2312 = vadd.f32 %v2296, 1.0
      %v2313 = vadd.f32 %v2297, 1.0
      %v2314 = vadd.f32 %v2298, 1.0
      %v2315 = vadd.f32 %v2299, 1.0
      %v2316 = vadd.f32 %v2300, 1.0
      %v2317 = vadd.f32 %v2301, 1.0
      %v2318 = vadd.f32 %v2302, 1.0
      %v2319 = vadd.f32 %v2303, 1.0
      %v2320 = vadd.f32 %v2304, 1.0
      %v2321 = vadd.f32 %v2305, 1.0
      %v2322 = vmul.f32 %v2258, %v2306
      %v2323 = vmul.f32 %v2259, %v2307
      %v2324 = vmul.f32 %v2260, %v2308
      %v2325 = vmul.f32 %v2261, %v2309
      %v2326 = vmul.f32 %v2262, %v2310
      %v2327 = vmul.f32 %v2263, %v2311
      %v2328 = vmul.f32 %v2264, %v2312
      %v2329 = vmul.f32 %v2265, %v2313
      %v2330 = vmul.f32 %v2266, %v2314
      %v2331 = vmul.f32 %v2267, %v2315
      %v2332 = vmul.f32 %v2268, %v2316
      %v2333 = vmul.f32 %v2269, %v2317
      %v2334 = vmul.f32 %v2270, %v2318
      %v2335 = vmul.f32 %v2271, %v2319
      %v2336 = vmul.f32 %v2272, %v2320
      %v2337 = vmul.f32 %v2273, %v2321
      %2338 = vrot.lane.b32.xlu0 %v352, 32
      %v2339 = vpop.permute.xlu0 %2338
      %v2342 = vsel %vm2064, %v2322, 0
      %v2345 = vsel %vm2064, %v2323, 0
      %v2348 = vsel %vm2064, %v2324, 0
      %v2351 = vsel %vm2064, %v2325, 0
      %v2354 = vsel %vm2064, %v2326, 0
      %v2357 = vsel %vm2064, %v2327, 0
      %v2360 = vsel %vm2064, %v2328, 0
      %v2363 = vsel %vm2064, %v2329, 0
      %v2366 = vsel %vm2064, %v2330, 0
      %v2369 = vsel %vm2064, %v2331, 0
      %v2372 = vsel %vm2064, %v2332, 0
      %v2375 = vsel %vm2064, %v2333, 0
      %v2378 = vsel %vm2064, %v2334, 0
      %v2381 = vsel %vm2064, %v2335, 0
      %v2384 = vsel %vm2064, %v2336, 0
      %v2387 = vsel %vm2064, %v2337, 0
      %2389 = vmatprep.subr.mxu0 0.0
      %2390 = vmatpush1.msra.mxu0 %v2057
      %2391 = vmatprep.subr.mxu0 0.0
      %2392 = vmatpush1.msra.mxu0 %v2058
      %2393 = vmatprep.subr.mxu0 0.0
      %2394 = vmatpush1.msra.mxu0 %v2059
      %2395 = vmatprep.subr.mxu0 0.0
      %2396 = vmatpush1.msra.mxu0 %v2060
      %2397 = vmatprep.subr.mxu0 0.0
      %2398 = vmatpush1.msra.mxu0 0.0
      %2399 = vmatprep.subr.mxu0 0.0
      %2400 = vmatpush1.msra.mxu0 0.0
      %2401 = vmatprep.subr.mxu0 0.0
      %2402 = vmatpush1.msra.mxu0 0.0
      %2403 = vmatprep.subr.mxu0 0.0
      %2404 = vmatpush1.msra.mxu0 0.0
      %2405 = vmatprep.subr.mxu0 0.0
      %2406 = vmatpush1.msra.mxu0 0.0
      %2407 = vmatprep.subr.mxu0 0.0
      %2408 = vmatpush1.msra.mxu0 0.0
      %2409 = vmatprep.subr.mxu0 0.0
      %2410 = vmatpush1.msra.mxu0 0.0
      %2411 = vmatprep.subr.mxu0 0.0
      %2412 = vmatpush1.msra.mxu0 0.0
      %2413 = vmatprep.subr.mxu0 0.0
      %2414 = vmatpush1.msra.mxu0 0.0
      %2415 = vmatprep.subr.mxu0 0.0
      %2416 = vmatpush1.msra.mxu0 0.0
      %2417 = vmatprep.subr.mxu0 0.0
      %2418 = vmatpush1.msra.mxu0 0.0
      %2419 = vmatprep.subr.mxu0 0.0
      %2420 = vmatpush1.msra.mxu0 0.0
      %2421 = vmatprep.subr.mxu0 0.0
      %2422 = vmatpush1.msra.mxu0 0.0
      %2423 = vmatprep.subr.mxu0 0.0
      %2424 = vmatpush1.msra.mxu0 0.0
      %2425 = vmatprep.subr.mxu0 0.0
      %2426 = vmatpush1.msra.mxu0 0.0
      %2427 = vmatprep.subr.mxu0 0.0
      %2428 = vmatpush1.msra.mxu0 0.0
      %2429 = vmatprep.subr.mxu0 0.0
      %2430 = vmatpush1.msra.mxu0 0.0
      %2431 = vmatprep.subr.mxu0 0.0
      %2432 = vmatpush1.msra.mxu0 0.0
      %2433 = vmatprep.subr.mxu0 0.0
      %2434 = vmatpush1.msra.mxu0 0.0
      %2435 = vmatprep.subr.mxu0 0.0
      %2436 = vmatpush1.msra.mxu0 0.0
      %2437 = vmatprep.subr.mxu0 0.0
      %2438 = vmatpush1.msra.mxu0 0.0
      %2439 = vmatprep.subr.mxu0 0.0
      %2440 = vmatpush1.msra.mxu0 0.0
      %2441 = vmatprep.subr.mxu0 0.0
      %2442 = vmatpush1.msra.mxu0 0.0
      %2443 = vmatprep.subr.mxu0 0.0
      %2444 = vmatpush1.msra.mxu0 0.0
      %2445 = vmatprep.subr.mxu0 0.0
      %2446 = vmatpush1.msra.mxu0 0.0
      %2447 = vmatprep.subr.mxu0 0.0
      %2448 = vmatpush1.msra.mxu0 0.0
      %2449 = vmatprep.subr.mxu0 0.0
      %2450 = vmatpush1.msra.mxu0 0.0
      %2451 = vmatprep.subr.mxu0 0.0
      %2452 = vmatpush1.msra.mxu0 0.0
      %2453 = vmatprep.mubr.f32.mxu0 0.0
      %2454 = vmatmul.mubr.f32.gmra.mrb[0].mxu0 %v2342
      %v2455 = vpop.f32.mrb[0].mxu0
      %v2456 = vadd.f32 %v2339, %v2455
      %v2457 = vpop.f32.mrb[0].mxu0
      %2458 = vmatprep.mubr.f32.mxu0 0.0
      %2459 = vmatmul.mubr.f32.gmra.mrb[0].mxu0 %v2345
      %v2460 = vpop.f32.mrb[0].mxu0
      %v2461 = vadd.f32 %v2339, %v2460
      %v2462 = vpop.f32.mrb[0].mxu0
      %2463 = vmatprep.mubr.f32.mxu0 0.0
      %2464 = vmatmul.mubr.f32.gmra.mrb[0].mxu0 %v2348
      %v2465 = vpop.f32.mrb[0].mxu0
      %v2466 = vadd.f32 %v2339, %v2465
      %v2467 = vpop.f32.mrb[0].mxu0
      %2468 = vmatprep.mubr.f32.mxu0 0.0
      %2469 = vmatmul.mubr.f32.gmra.mrb[0].mxu0 %v2351
      %v2470 = vpop.f32.mrb[0].mxu0
      %v2471 = vadd.f32 %v2339, %v2470
      %v2472 = vpop.f32.mrb[0].mxu0
      %2473 = vmatprep.mubr.f32.mxu0 0.0
      %2474 = vmatmul.mubr.f32.gmra.mrb[0].mxu0 %v2354
      %v2475 = vpop.f32.mrb[0].mxu0
      %v2476 = vadd.f32 %v2339, %v2475
      %v2477 = vpop.f32.mrb[0].mxu0
      %2478 = vmatprep.mubr.f32.mxu0 0.0
      %2479 = vmatmul.mubr.f32.gmra.mrb[0].mxu0 %v2357
      %v2480 = vpop.f32.mrb[0].mxu0
      %v2481 = vadd.f32 %v2339, %v2480
      %v2482 = vpop.f32.mrb[0].mxu0
      %2483 = vmatprep.mubr.f32.mxu0 0.0
      %2484 = vmatmul.mubr.f32.gmra.mrb[0].mxu0 %v2360
      %v2485 = vpop.f32.mrb[0].mxu0
      %v2486 = vadd.f32 %v2339, %v2485
      %v2487 = vpop.f32.mrb[0].mxu0
      %2488 = vmatprep.mubr.f32.mxu0 0.0
      %2489 = vmatmul.mubr.f32.gmra.mrb[0].mxu0 %v2363
      %v2490 = vpop.f32.mrb[0].mxu0
      %v2491 = vadd.f32 %v2339, %v2490
      %v2492 = vpop.f32.mrb[0].mxu0
      %2493 = vmatprep.mubr.f32.mxu0 0.0
      %2494 = vmatmul.mubr.f32.gmra.mrb[0].mxu0 %v2366
      %v2495 = vpop.f32.mrb[0].mxu0
      %v2496 = vadd.f32 %v2339, %v2495
      %v2497 = vpop.f32.mrb[0].mxu0
      %2498 = vmatprep.mubr.f32.mxu0 0.0
      %2499 = vmatmul.mubr.f32.gmra.mrb[0].mxu0 %v2369
      %v2500 = vpop.f32.mrb[0].mxu0
      %v2501 = vadd.f32 %v2339, %v2500
      %v2502 = vpop.f32.mrb[0].mxu0
      %2503 = vmatprep.mubr.f32.mxu0 0.0
      %2504 = vmatmul.mubr.f32.gmra.mrb[0].mxu0 %v2372
      %v2505 = vpop.f32.mrb[0].mxu0
      %v2506 = vadd.f32 %v2339, %v2505
      %v2507 = vpop.f32.mrb[0].mxu0
      %2508 = vmatprep.mubr.f32.mxu0 0.0
      %2509 = vmatmul.mubr.f32.gmra.mrb[0].mxu0 %v2375
      %v2510 = vpop.f32.mrb[0].mxu0
      %v2511 = vadd.f32 %v2339, %v2510
      %v2512 = vpop.f32.mrb[0].mxu0
      %2513 = vmatprep.mubr.f32.mxu0 0.0
      %2514 = vmatmul.mubr.f32.gmra.mrb[0].mxu0 %v2378
      %v2515 = vpop.f32.mrb[0].mxu0
      %v2516 = vadd.f32 %v2339, %v2515
      %v2517 = vpop.f32.mrb[0].mxu0
      %2518 = vmatprep.mubr.f32.mxu0 0.0
      %2519 = vmatmul.mubr.f32.gmra.mrb[0].mxu0 %v2381
      %v2520 = vpop.f32.mrb[0].mxu0
      %v2521 = vadd.f32 %v2339, %v2520
      %v2522 = vpop.f32.mrb[0].mxu0
      %2523 = vmatprep.mubr.f32.mxu0 0.0
      %2524 = vmatmul.mubr.f32.gmra.mrb[0].mxu0 %v2384
      %v2525 = vpop.f32.mrb[0].mxu0
      %v2526 = vadd.f32 %v2339, %v2525
      %v2527 = vpop.f32.mrb[0].mxu0
      %2528 = vmatprep.mubr.f32.mxu0 0.0
      %2529 = vmatmul.mubr.f32.gmra.mrb[0].mxu0 %v2387
      %v2530 = vpop.f32.mrb[0].mxu0
      %v2531 = vadd.f32 %v2339, %v2530
      %v2532 = vpop.f32.mrb[0].mxu0
      %2533 = vdwg.mxu0
      %v2534 = vxor.u32 %v2456, 2147483648
      %v2535 = vxor.u32 %v2461, 2147483648
      %v2536 = vxor.u32 %v2466, 2147483648
      %v2537 = vxor.u32 %v2471, 2147483648
      %v2538 = vxor.u32 %v2476, 2147483648
      %v2539 = vxor.u32 %v2481, 2147483648
      %v2540 = vxor.u32 %v2486, 2147483648
      %v2541 = vxor.u32 %v2491, 2147483648
      %v2542 = vxor.u32 %v2496, 2147483648
      %v2543 = vxor.u32 %v2501, 2147483648
      %v2544 = vxor.u32 %v2506, 2147483648
      %v2545 = vxor.u32 %v2511, 2147483648
      %v2546 = vxor.u32 %v2516, 2147483648
      %v2547 = vxor.u32 %v2521, 2147483648
      %v2548 = vxor.u32 %v2526, 2147483648
      %v2549 = vxor.u32 %v2531, 2147483648
      %v2550 = vmul.f32 %v2534, 1.442695
      %v2551 = vpow.pop %v2550
      %v2552 = vmul.f32 %v2535, 1.442695
      %v2553 = vpow.pop %v2552
      %v2554 = vmul.f32 %v2536, 1.442695
      %v2555 = vpow.pop %v2554
      %v2556 = vmul.f32 %v2537, 1.442695
      %v2557 = vpow.pop %v2556
      %v2558 = vmul.f32 %v2538, 1.442695
      %v2559 = vpow.pop %v2558
      %v2560 = vmul.f32 %v2539, 1.442695
      %v2561 = vpow.pop %v2560
      %v2562 = vmul.f32 %v2540, 1.442695
      %v2563 = vpow.pop %v2562
      %v2564 = vmul.f32 %v2541, 1.442695
      %v2565 = vpow.pop %v2564
      %v2566 = vmul.f32 %v2542, 1.442695
      %v2567 = vpow.pop %v2566
      %v2568 = vmul.f32 %v2543, 1.442695
      %v2569 = vpow.pop %v2568
      %v2570 = vmul.f32 %v2544, 1.442695
      %v2571 = vpow.pop %v2570
      %v2572 = vmul.f32 %v2545, 1.442695
      %v2573 = vpow.pop %v2572
      %v2574 = vmul.f32 %v2546, 1.442695
      %v2575 = vpow.pop %v2574
      %v2576 = vmul.f32 %v2547, 1.442695
      %v2577 = vpow.pop %v2576
      %v2578 = vmul.f32 %v2548, 1.442695
      %v2579 = vpow.pop %v2578
      %v2580 = vmul.f32 %v2549, 1.442695
      %v2581 = vpow.pop %v2580
      %v2582 = vadd.f32 %v2551, 1.0
      %v2583 = vadd.f32 %v2553, 1.0
      %v2584 = vadd.f32 %v2555, 1.0
      %v2585 = vadd.f32 %v2557, 1.0
      %v2586 = vadd.f32 %v2559, 1.0
      %v2587 = vadd.f32 %v2561, 1.0
      %v2588 = vadd.f32 %v2563, 1.0
      %v2589 = vadd.f32 %v2565, 1.0
      %v2590 = vadd.f32 %v2567, 1.0
      %v2591 = vadd.f32 %v2569, 1.0
      %v2592 = vadd.f32 %v2571, 1.0
      %v2593 = vadd.f32 %v2573, 1.0
      %v2594 = vadd.f32 %v2575, 1.0
      %v2595 = vadd.f32 %v2577, 1.0
      %v2596 = vadd.f32 %v2579, 1.0
      %v2597 = vadd.f32 %v2581, 1.0
      %v2598 = vrcp.pop %v2582
      %v2599 = vmul.f32 1.0, %v2598
      %v2600 = vrcp.pop %v2583
      %v2601 = vmul.f32 1.0, %v2600
      %v2602 = vrcp.pop %v2584
      %v2603 = vmul.f32 1.0, %v2602
      %v2604 = vrcp.pop %v2585
      %v2605 = vmul.f32 1.0, %v2604
      %v2606 = vrcp.pop %v2586
      %v2607 = vmul.f32 1.0, %v2606
      %v2608 = vrcp.pop %v2587
      %v2609 = vmul.f32 1.0, %v2608
      %v2610 = vrcp.pop %v2588
      %v2611 = vmul.f32 1.0, %v2610
      %v2612 = vrcp.pop %v2589
      %v2613 = vmul.f32 1.0, %v2612
      %v2614 = vrcp.pop %v2590
      %v2615 = vmul.f32 1.0, %v2614
      %v2616 = vrcp.pop %v2591
      %v2617 = vmul.f32 1.0, %v2616
      %v2618 = vrcp.pop %v2592
      %v2619 = vmul.f32 1.0, %v2618
      %v2620 = vrcp.pop %v2593
      %v2621 = vmul.f32 1.0, %v2620
      %v2622 = vrcp.pop %v2594
      %v2623 = vmul.f32 1.0, %v2622
      %v2624 = vrcp.pop %v2595
      %v2625 = vmul.f32 1.0, %v2624
      %v2626 = vrcp.pop %v2596
      %v2627 = vmul.f32 1.0, %v2626
      %v2628 = vrcp.pop %v2597
      %v2629 = vmul.f32 1.0, %v2628
      %v2630 = vmul.f32 %v2456, %v2599
      %v2631 = vmul.f32 %v2461, %v2601
      %v2632 = vmul.f32 %v2466, %v2603
      %v2633 = vmul.f32 %v2471, %v2605
      %v2634 = vmul.f32 %v2476, %v2607
      %v2635 = vmul.f32 %v2481, %v2609
      %v2636 = vmul.f32 %v2486, %v2611
      %v2637 = vmul.f32 %v2491, %v2613
      %v2638 = vmul.f32 %v2496, %v2615
      %v2639 = vmul.f32 %v2501, %v2617
      %v2640 = vmul.f32 %v2506, %v2619
      %v2641 = vmul.f32 %v2511, %v2621
      %v2642 = vmul.f32 %v2516, %v2623
      %v2643 = vmul.f32 %v2521, %v2625
      %v2644 = vmul.f32 %v2526, %v2627
      %v2645 = vmul.f32 %v2531, %v2629
      %v2646 = vld [vmem:[%s3] sm:$0xff]
      %v2647 = vld [vmem:[%s3 + $0x8] sm:$0xff]
      %v2648 = vld [vmem:[%s3 + $0x10] sm:$0xff]
      %v2649 = vld [vmem:[%s3 + $0x18] sm:$0xff]
      %v2651 = vlaneseq
      %v2652 = vshrl.u32 %v2651, 7
      %v2653 = vsub.s32 0, %v2652
      %v2654 = vrot.slane %v251, %v2653
      %v2657 = vsel %vm2064, %v2630, 0
      %v2660 = vsel %vm2064, %v2631, 0
      %v2663 = vsel %vm2064, %v2632, 0
      %v2666 = vsel %vm2064, %v2633, 0
      %v2669 = vsel %vm2064, %v2634, 0
      %v2672 = vsel %vm2064, %v2635, 0
      %v2675 = vsel %vm2064, %v2636, 0
      %v2678 = vsel %vm2064, %v2637, 0
      %v2681 = vsel %vm2064, %v2638, 0
      %v2684 = vsel %vm2064, %v2639, 0
      %v2687 = vsel %vm2064, %v2640, 0
      %v2690 = vsel %vm2064, %v2641, 0
      %v2693 = vsel %vm2064, %v2642, 0
      %v2696 = vsel %vm2064, %v2643, 0
      %v2699 = vsel %vm2064, %v2644, 0
      %v2702 = vsel %vm2064, %v2645, 0
      %2704 = vmatprep.subr.mxu0 0.0
      %2705 = vmatpush1.msra.mxu0 %v2646
      %2706 = vmatprep.subr.mxu0 0.0
      %2707 = vmatpush1.msra.mxu0 %v2647
      %2708 = vmatprep.subr.mxu0 0.0
      %2709 = vmatpush1.msra.mxu0 %v2648
      %2710 = vmatprep.subr.mxu0 0.0
      %2711 = vmatpush1.msra.mxu0 %v2649
      %2712 = vmatprep.subr.mxu0 0.0
      %2713 = vmatpush1.msra.mxu0 0.0
      %2714 = vmatprep.subr.mxu0 0.0
      %2715 = vmatpush1.msra.mxu0 0.0
      %2716 = vmatprep.subr.mxu0 0.0
      %2717 = vmatpush1.msra.mxu0 0.0
      %2718 = vmatprep.subr.mxu0 0.0
      %2719 = vmatpush1.msra.mxu0 0.0
      %2720 = vmatprep.subr.mxu0 0.0
      %2721 = vmatpush1.msra.mxu0 0.0
      %2722 = vmatprep.subr.mxu0 0.0
      %2723 = vmatpush1.msra.mxu0 0.0
      %2724 = vmatprep.subr.mxu0 0.0
      %2725 = vmatpush1.msra.mxu0 0.0
      %2726 = vmatprep.subr.mxu0 0.0
      %2727 = vmatpush1.msra.mxu0 0.0
      %2728 = vmatprep.subr.mxu0 0.0
      %2729 = vmatpush1.msra.mxu0 0.0
      %2730 = vmatprep.subr.mxu0 0.0
      %2731 = vmatpush1.msra.mxu0 0.0
      %2732 = vmatprep.subr.mxu0 0.0
      %2733 = vmatpush1.msra.mxu0 0.0
      %2734 = vmatprep.subr.mxu0 0.0
      %2735 = vmatpush1.msra.mxu0 0.0
      %2736 = vmatprep.subr.mxu0 0.0
      %2737 = vmatpush1.msra.mxu0 0.0
      %2738 = vmatprep.subr.mxu0 0.0
      %2739 = vmatpush1.msra.mxu0 0.0
      %2740 = vmatprep.subr.mxu0 0.0
      %2741 = vmatpush1.msra.mxu0 0.0
      %2742 = vmatprep.subr.mxu0 0.0
      %2743 = vmatpush1.msra.mxu0 0.0
      %2744 = vmatprep.subr.mxu0 0.0
      %2745 = vmatpush1.msra.mxu0 0.0
      %2746 = vmatprep.subr.mxu0 0.0
      %2747 = vmatpush1.msra.mxu0 0.0
      %2748 = vmatprep.subr.mxu0 0.0
      %2749 = vmatpush1.msra.mxu0 0.0
      %2750 = vmatprep.subr.mxu0 0.0
      %2751 = vmatpush1.msra.mxu0 0.0
      %2752 = vmatprep.subr.mxu0 0.0
      %2753 = vmatpush1.msra.mxu0 0.0
      %2754 = vmatprep.subr.mxu0 0.0
      %2755 = vmatpush1.msra.mxu0 0.0
      %2756 = vmatprep.subr.mxu0 0.0
      %2757 = vmatpush1.msra.mxu0 0.0
      %2758 = vmatprep.subr.mxu0 0.0
      %2759 = vmatpush1.msra.mxu0 0.0
      %2760 = vmatprep.subr.mxu0 0.0
      %2761 = vmatpush1.msra.mxu0 0.0
      %2762 = vmatprep.subr.mxu0 0.0
      %2763 = vmatpush1.msra.mxu0 0.0
      %2764 = vmatprep.subr.mxu0 0.0
      %2765 = vmatpush1.msra.mxu0 0.0
      %2766 = vmatprep.subr.mxu0 0.0
      %2767 = vmatpush1.msra.mxu0 0.0
      %2768 = vmatprep.mubr.f32.mxu0 0.0
      %2769 = vmatmul.mubr.f32.gmra.mrb[0].mxu0 %v2657
      %v2770 = vpop.f32.mrb[0].mxu0
      %v2771 = vadd.f32 %v2654, %v2770
      %v2772 = vpop.f32.mrb[0].mxu0
      %2773 = vmatprep.mubr.f32.mxu0 0.0
      %2774 = vmatmul.mubr.f32.gmra.mrb[0].mxu0 %v2660
      %v2775 = vpop.f32.mrb[0].mxu0
      %v2776 = vadd.f32 %v2654, %v2775
      %v2777 = vpop.f32.mrb[0].mxu0
      %2778 = vmatprep.mubr.f32.mxu0 0.0
      %2779 = vmatmul.mubr.f32.gmra.mrb[0].mxu0 %v2663
      %v2780 = vpop.f32.mrb[0].mxu0
      %v2781 = vadd.f32 %v2654, %v2780
      %v2782 = vpop.f32.mrb[0].mxu0
      %2783 = vmatprep.mubr.f32.mxu0 0.0
      %2784 = vmatmul.mubr.f32.gmra.mrb[0].mxu0 %v2666
      %v2785 = vpop.f32.mrb[0].mxu0
      %v2786 = vadd.f32 %v2654, %v2785
      %v2787 = vpop.f32.mrb[0].mxu0
      %2788 = vmatprep.mubr.f32.mxu0 0.0
      %2789 = vmatmul.mubr.f32.gmra.mrb[0].mxu0 %v2669
      %v2790 = vpop.f32.mrb[0].mxu0
      %v2791 = vadd.f32 %v2654, %v2790
      %v2792 = vpop.f32.mrb[0].mxu0
      %2793 = vmatprep.mubr.f32.mxu0 0.0
      %2794 = vmatmul.mubr.f32.gmra.mrb[0].mxu0 %v2672
      %v2795 = vpop.f32.mrb[0].mxu0
      %v2796 = vadd.f32 %v2654, %v2795
      %v2797 = vpop.f32.mrb[0].mxu0
      %2798 = vmatprep.mubr.f32.mxu0 0.0
      %2799 = vmatmul.mubr.f32.gmra.mrb[0].mxu0 %v2675
      %v2800 = vpop.f32.mrb[0].mxu0
      %v2801 = vadd.f32 %v2654, %v2800
      %v2802 = vpop.f32.mrb[0].mxu0
      %2803 = vmatprep.mubr.f32.mxu0 0.0
      %2804 = vmatmul.mubr.f32.gmra.mrb[0].mxu0 %v2678
      %v2805 = vpop.f32.mrb[0].mxu0
      %v2806 = vadd.f32 %v2654, %v2805
      %v2807 = vpop.f32.mrb[0].mxu0
      %2808 = vmatprep.mubr.f32.mxu0 0.0
      %2809 = vmatmul.mubr.f32.gmra.mrb[0].mxu0 %v2681
      %v2810 = vpop.f32.mrb[0].mxu0
      %v2811 = vadd.f32 %v2654, %v2810
      %v2812 = vpop.f32.mrb[0].mxu0
      %2813 = vmatprep.mubr.f32.mxu0 0.0
      %2814 = vmatmul.mubr.f32.gmra.mrb[0].mxu0 %v2684
      %v2815 = vpop.f32.mrb[0].mxu0
      %v2816 = vadd.f32 %v2654, %v2815
      %v2817 = vpop.f32.mrb[0].mxu0
      %2818 = vmatprep.mubr.f32.mxu0 0.0
      %2819 = vmatmul.mubr.f32.gmra.mrb[0].mxu0 %v2687
      %v2820 = vpop.f32.mrb[0].mxu0
      %v2821 = vadd.f32 %v2654, %v2820
      %v2822 = vpop.f32.mrb[0].mxu0
      %2823 = vmatprep.mubr.f32.mxu0 0.0
      %2824 = vmatmul.mubr.f32.gmra.mrb[0].mxu0 %v2690
      %v2825 = vpop.f32.mrb[0].mxu0
      %v2826 = vadd.f32 %v2654, %v2825
      %v2827 = vpop.f32.mrb[0].mxu0
      %2828 = vmatprep.mubr.f32.mxu0 0.0
      %2829 = vmatmul.mubr.f32.gmra.mrb[0].mxu0 %v2693
      %v2830 = vpop.f32.mrb[0].mxu0
      %v2831 = vadd.f32 %v2654, %v2830
      %v2832 = vpop.f32.mrb[0].mxu0
      %2833 = vmatprep.mubr.f32.mxu0 0.0
      %2834 = vmatmul.mubr.f32.gmra.mrb[0].mxu0 %v2696
      %v2835 = vpop.f32.mrb[0].mxu0
      %v2836 = vadd.f32 %v2654, %v2835
      %v2837 = vpop.f32.mrb[0].mxu0
      %2838 = vmatprep.mubr.f32.mxu0 0.0
      %2839 = vmatmul.mubr.f32.gmra.mrb[0].mxu0 %v2699
      %v2840 = vpop.f32.mrb[0].mxu0
      %v2841 = vadd.f32 %v2654, %v2840
      %v2842 = vpop.f32.mrb[0].mxu0
      %2843 = vmatprep.mubr.f32.mxu0 0.0
      %2844 = vmatmul.mubr.f32.gmra.mrb[0].mxu0 %v2702
      %v2845 = vpop.f32.mrb[0].mxu0
      %v2846 = vadd.f32 %v2654, %v2845
      %v2847 = vpop.f32.mrb[0].mxu0
      %2848 = vdwg.mxu0
      %v2849 = vld [vmem:[%s242] sm:$0xff]
      %v2850 = vld [vmem:[%s242 + $0x8] sm:$0xff]
      %v2851 = vld [vmem:[%s242 + $0x10] sm:$0xff]
      %v2852 = vld [vmem:[%s242 + $0x18] sm:$0xff]
      %v2853 = vld [vmem:[%s242 + $0x20] sm:$0xff]
      %v2854 = vld [vmem:[%s242 + $0x28] sm:$0xff]
      %v2855 = vld [vmem:[%s242 + $0x30] sm:$0xff]
      %v2856 = vld [vmem:[%s242 + $0x38] sm:$0xff]
      %v2857 = vld [vmem:[%s242 + $0x40] sm:$0xff]
      %v2858 = vld [vmem:[%s242 + $0x48] sm:$0xff]
      %v2859 = vld [vmem:[%s242 + $0x50] sm:$0xff]
      %v2860 = vld [vmem:[%s242 + $0x58] sm:$0xff]
      %v2861 = vld [vmem:[%s242 + $0x60] sm:$0xff]
      %v2862 = vld [vmem:[%s242 + $0x68] sm:$0xff]
      %v2863 = vld [vmem:[%s242 + $0x70] sm:$0xff]
      %v2864 = vld [vmem:[%s242 + $0x78] sm:$0xff]
      %v2865 = vmul.f32 %v2771, %v2849
      %v2866 = vmul.f32 %v2776, %v2850
      %v2867 = vmul.f32 %v2781, %v2851
      %v2868 = vmul.f32 %v2786, %v2852
      %v2869 = vmul.f32 %v2791, %v2853
      %v2870 = vmul.f32 %v2796, %v2854
      %v2871 = vmul.f32 %v2801, %v2855
      %v2872 = vmul.f32 %v2806, %v2856
      %v2873 = vmul.f32 %v2811, %v2857
      %v2874 = vmul.f32 %v2816, %v2858
      %v2875 = vmul.f32 %v2821, %v2859
      %v2876 = vmul.f32 %v2826, %v2860
      %v2877 = vmul.f32 %v2831, %v2861
      %v2878 = vmul.f32 %v2836, %v2862
      %v2879 = vmul.f32 %v2841, %v2863
      %v2880 = vmul.f32 %v2846, %v2864
      %2897 = vrot.lane.b32.xlu0 %v2771, 96
      %v2898 = vpop.permute.xlu0 %2897
      %2899 = vrot.lane.b32.xlu0 %v2776, 96
      %v2900 = vpop.permute.xlu0 %2899
      %2901 = vrot.lane.b32.xlu0 %v2781, 96
      %v2902 = vpop.permute.xlu0 %2901
      %2903 = vrot.lane.b32.xlu0 %v2786, 96
      %v2904 = vpop.permute.xlu0 %2903
      %2905 = vrot.lane.b32.xlu0 %v2791, 96
      %v2906 = vpop.permute.xlu0 %2905
      %2907 = vrot.lane.b32.xlu0 %v2796, 96
      %v2908 = vpop.permute.xlu0 %2907
      %2909 = vrot.lane.b32.xlu0 %v2801, 96
      %v2910 = vpop.permute.xlu0 %2909
      %2911 = vrot.lane.b32.xlu0 %v2806, 96
      %v2912 = vpop.permute.xlu0 %2911
      %2913 = vrot.lane.b32.xlu0 %v2811, 96
      %v2914 = vpop.permute.xlu0 %2913
      %2915 = vrot.lane.b32.xlu0 %v2816, 96
      %v2916 = vpop.permute.xlu0 %2915
      %2917 = vrot.lane.b32.xlu0 %v2821, 96
      %v2918 = vpop.permute.xlu0 %2917
      %2919 = vrot.lane.b32.xlu0 %v2826, 96
      %v2920 = vpop.permute.xlu0 %2919
      %2921 = vrot.lane.b32.xlu0 %v2831, 96
      %v2922 = vpop.permute.xlu0 %2921
      %2923 = vrot.lane.b32.xlu0 %v2836, 96
      %v2924 = vpop.permute.xlu0 %2923
      %2925 = vrot.lane.b32.xlu0 %v2841, 96
      %v2926 = vpop.permute.xlu0 %2925
      %2927 = vrot.lane.b32.xlu0 %v2846, 96
      %v2928 = vpop.permute.xlu0 %2927
      %v2945 = vadd.f32 %v2865, %v2898
      %v2946 = vadd.f32 %v2866, %v2900
      %v2947 = vadd.f32 %v2867, %v2902
      %v2948 = vadd.f32 %v2868, %v2904
      %v2949 = vadd.f32 %v2869, %v2906
      %v2950 = vadd.f32 %v2870, %v2908
      %v2951 = vadd.f32 %v2871, %v2910
      %v2952 = vadd.f32 %v2872, %v2912
      %v2953 = vadd.f32 %v2873, %v2914
      %v2954 = vadd.f32 %v2874, %v2916
      %v2955 = vadd.f32 %v2875, %v2918
      %v2956 = vadd.f32 %v2876, %v2920
      %v2957 = vadd.f32 %v2877, %v2922
      %v2958 = vadd.f32 %v2878, %v2924
      %v2959 = vadd.f32 %v2879, %v2926
      %v2960 = vadd.f32 %v2880, %v2928
      %2977 = vrot.lane.b32.xlu0 %v2945, 64
      %v2978 = vpop.permute.xlu0 %2977
      %2979 = vrot.lane.b32.xlu0 %v2946, 64
      %v2980 = vpop.permute.xlu0 %2979
      %2981 = vrot.lane.b32.xlu0 %v2947, 64
      %v2982 = vpop.permute.xlu0 %2981
      %2983 = vrot.lane.b32.xlu0 %v2948, 64
      %v2984 = vpop.permute.xlu0 %2983
      %2985 = vrot.lane.b32.xlu0 %v2949, 64
      %v2986 = vpop.permute.xlu0 %2985
      %2987 = vrot.lane.b32.xlu0 %v2950, 64
      %v2988 = vpop.permute.xlu0 %2987
      %2989 = vrot.lane.b32.xlu0 %v2951, 64
      %v2990 = vpop.permute.xlu0 %2989
      %2991 = vrot.lane.b32.xlu0 %v2952, 64
      %v2992 = vpop.permute.xlu0 %2991
      %2993 = vrot.lane.b32.xlu0 %v2953, 64
      %v2994 = vpop.permute.xlu0 %2993
      %2995 = vrot.lane.b32.xlu0 %v2954, 64
      %v2996 = vpop.permute.xlu0 %2995
      %2997 = vrot.lane.b32.xlu0 %v2955, 64
      %v2998 = vpop.permute.xlu0 %2997
      %2999 = vrot.lane.b32.xlu0 %v2956, 64
      %v3000 = vpop.permute.xlu0 %2999
      %3001 = vrot.lane.b32.xlu0 %v2957, 64
      %v3002 = vpop.permute.xlu0 %3001
      %3003 = vrot.lane.b32.xlu0 %v2958, 64
      %v3004 = vpop.permute.xlu0 %3003
      %3005 = vrot.lane.b32.xlu0 %v2959, 64
      %v3006 = vpop.permute.xlu0 %3005
      %3007 = vrot.lane.b32.xlu0 %v2960, 64
      %v3008 = vpop.permute.xlu0 %3007
      %v3025 = vmul.f32 %v2771, %v2978
      %v3026 = vmul.f32 %v2776, %v2980
      %v3027 = vmul.f32 %v2781, %v2982
      %v3028 = vmul.f32 %v2786, %v2984
      %v3029 = vmul.f32 %v2791, %v2986
      %v3030 = vmul.f32 %v2796, %v2988
      %v3031 = vmul.f32 %v2801, %v2990
      %v3032 = vmul.f32 %v2806, %v2992
      %v3033 = vmul.f32 %v2811, %v2994
      %v3034 = vmul.f32 %v2816, %v2996
      %v3035 = vmul.f32 %v2821, %v2998
      %v3036 = vmul.f32 %v2826, %v3000
      %v3037 = vmul.f32 %v2831, %v3002
      %v3038 = vmul.f32 %v2836, %v3004
      %v3039 = vmul.f32 %v2841, %v3006
      %v3040 = vmul.f32 %v2846, %v3008
      %v3041 = vadd.f32 %v3025, %v2898
      %v3042 = vadd.f32 %v3026, %v2900
      %v3043 = vadd.f32 %v3027, %v2902
      %v3044 = vadd.f32 %v3028, %v2904
      %v3045 = vadd.f32 %v3029, %v2906
      %v3046 = vadd.f32 %v3030, %v2908
      %v3047 = vadd.f32 %v3031, %v2910
      %v3048 = vadd.f32 %v3032, %v2912
      %v3049 = vadd.f32 %v3033, %v2914
      %v3050 = vadd.f32 %v3034, %v2916
      %v3051 = vadd.f32 %v3035, %v2918
      %v3052 = vadd.f32 %v3036, %v2920
      %v3053 = vadd.f32 %v3037, %v2922
      %v3054 = vadd.f32 %v3038, %v2924
      %v3055 = vadd.f32 %v3039, %v2926
      %v3056 = vadd.f32 %v3040, %v2928
      %3073 = vrot.lane.b32.xlu0 %v3041, 64
      %v3074 = vpop.permute.xlu0 %3073
      %3075 = vrot.lane.b32.xlu0 %v3042, 64
      %v3076 = vpop.permute.xlu0 %3075
      %3077 = vrot.lane.b32.xlu0 %v3043, 64
      %v3078 = vpop.permute.xlu0 %3077
      %3079 = vrot.lane.b32.xlu0 %v3044, 64
      %v3080 = vpop.permute.xlu0 %3079
      %3081 = vrot.lane.b32.xlu0 %v3045, 64
      %v3082 = vpop.permute.xlu0 %3081
      %3083 = vrot.lane.b32.xlu0 %v3046, 64
      %v3084 = vpop.permute.xlu0 %3083
      %3085 = vrot.lane.b32.xlu0 %v3047, 64
      %v3086 = vpop.permute.xlu0 %3085
      %3087 = vrot.lane.b32.xlu0 %v3048, 64
      %v3088 = vpop.permute.xlu0 %3087
      %3089 = vrot.lane.b32.xlu0 %v3049, 64
      %v3090 = vpop.permute.xlu0 %3089
      %3091 = vrot.lane.b32.xlu0 %v3050, 64
      %v3092 = vpop.permute.xlu0 %3091
      %3093 = vrot.lane.b32.xlu0 %v3051, 64
      %v3094 = vpop.permute.xlu0 %3093
      %3095 = vrot.lane.b32.xlu0 %v3052, 64
      %v3096 = vpop.permute.xlu0 %3095
      %3097 = vrot.lane.b32.xlu0 %v3053, 64
      %v3098 = vpop.permute.xlu0 %3097
      %3099 = vrot.lane.b32.xlu0 %v3054, 64
      %v3100 = vpop.permute.xlu0 %3099
      %3101 = vrot.lane.b32.xlu0 %v3055, 64
      %v3102 = vpop.permute.xlu0 %3101
      %3103 = vrot.lane.b32.xlu0 %v3056, 64
      %v3104 = vpop.permute.xlu0 %3103
      %3121 = vst.msk [vmem:[%s248] sm:$0xff] %vm2064, %v3074
      %3122 = vst.msk [vmem:[%s248 + $0x8] sm:$0xff] %vm2064, %v3076
      %3123 = vst.msk [vmem:[%s248 + $0x10] sm:$0xff] %vm2064, %v3078
      %3124 = vst.msk [vmem:[%s248 + $0x18] sm:$0xff] %vm2064, %v3080
      %3125 = vst.msk [vmem:[%s248 + $0x20] sm:$0xff] %vm2064, %v3082
      %3126 = vst.msk [vmem:[%s248 + $0x28] sm:$0xff] %vm2064, %v3084
      %3127 = vst.msk [vmem:[%s248 + $0x30] sm:$0xff] %vm2064, %v3086
      %3128 = vst.msk [vmem:[%s248 + $0x38] sm:$0xff] %vm2064, %v3088
      %3129 = vst.msk [vmem:[%s248 + $0x40] sm:$0xff] %vm2064, %v3090
      %3130 = vst.msk [vmem:[%s248 + $0x48] sm:$0xff] %vm2064, %v3092
      %3131 = vst.msk [vmem:[%s248 + $0x50] sm:$0xff] %vm2064, %v3094
      %3132 = vst.msk [vmem:[%s248 + $0x58] sm:$0xff] %vm2064, %v3096
      %3133 = vst.msk [vmem:[%s248 + $0x60] sm:$0xff] %vm2064, %v3098
      %3134 = vst.msk [vmem:[%s248 + $0x68] sm:$0xff] %vm2064, %v3100
      %3135 = vst.msk [vmem:[%s248 + $0x70] sm:$0xff] %vm2064, %v3102
      %3136 = vst.msk [vmem:[%s248 + $0x78] sm:$0xff] %vm2064, %v3104
      %s3137 = smul.u32 16, %s16
      %p3138 = scmp.lt.s32.totalorder %s3137, 31
      %s3139 = scalar_select %p3138, %s3137, 31
      %s3140 = smul.addr %s3139, 8
      %s3141 = scalar_lea.vmem %s5, %s3140
      // Predicated region
      $region41: #{tpu_custom_call.1} parent=39 // pred_check
        %p3142 = pneg %p149
      $region42: #{tpu_custom_call.1} parent=39 // pred_check_branch
        %3144 = sbr.rel (%p3142) target = $region44
      $region43: #{tpu_custom_call.1} parent=39 // pred_region
        %s3145 = smul.u32 16, %s16
      $region44: #{tpu_custom_call.1} parent=39 // pred_fallthru
        _
    $region40: #{tpu_custom_call.1} parent=5 // pred_fallthru
      _
    %p3146 = scmp.le.s32.totalorder 2, %s11
    // Predicated region
    $region45: #{tpu_custom_call.1} parent=5 // pred_check
      %p3147 = pneg %p3146
    $region46: #{tpu_custom_call.1} parent=5 // pred_check_branch
      %3149 = sbr.rel (%p3147) target = $region48
    $region47: #{tpu_custom_call.1} parent=5 // pred_region
      %s3150 = ssub.s32 %s11, 2
      // Predicated region
      $region49: #{tpu_custom_call.1} parent=47 // pred_check
        %p3151 = pneg %p155
      $region50: #{tpu_custom_call.1} parent=47 // pred_check_branch
        %3153 = sbr.rel (%p3151) target = $region52
      $region51: #{tpu_custom_call.1} parent=47 // pred_region
        %s3154 = smul.u32 16, %s17
        %p3155 = scmp.lt.s32.totalorder %s3154, 31
        %s3156 = scalar_select %p3155, %s3154, 31
        %s3157 = smul.addr %s3156, 8
        %s3158 = scalar_lea.vmem %s5, %s3157
      $region52: #{tpu_custom_call.1} parent=47 // pred_fallthru
        _
    $region48: #{tpu_custom_call.1} parent=5 // pred_fallthru
      _
  $region6: #{tpu_custom_call.1} parent=0 // loop_footer
    %s15 = sadd.s32 1, %s11
  $region7: #{tpu_custom_call.1} parent=0 // loop_footer_branch
    %10 = sbr.rel target = $region3
  $region8: #{tpu_custom_call.1} parent=0 // loop_exit
    _

</llo_original>
